<compile_context>
chip_gen: v6e
topology: v6e:2x2x1
jax: 0.10.0
libtpu: 0.0.40
codegen_flags: <defaults>
</compile_context>

<pallas_src>
import functools

import jax
import jax.numpy as jnp
from jax import lax
from jax.experimental import pallas as pl
from jax.experimental.pallas import tpu as pltpu

EPS = 1e-5


def _vmem_limit_bytes():
    """Generation-aware VMEM budget (~3/4 of physical: v5e/v6e 128 MiB, v7x 64 MiB/TC)."""
    cap = None
    try:
        cap = getattr(pltpu.get_tpu_info(), "vmem_capacity_bytes", None)
    except Exception:
        cap = None
    if not cap:
        cap = 64 * 1024 * 1024  # conservative fallback (v7x physical size)
    return int(min(cap * 3 // 4, 96 * 1024 * 1024))


def _shifted(h, off):
    """Column l of the result equals h[..., l + off]; zero outside [0, L).  off in {-1, +1}."""
    L = h.shape[-1]
    lane_axis = h.ndim - 1
    if L % 128 == 0:
        # Lane-aligned: XLU rotate (separate issue slot) + VPU boundary mask.
        lane = lax.broadcasted_iota(jnp.int32, h.shape, lane_axis)
        rolled = pltpu.roll(h, (-off) % L, axis=lane_axis)
        bad = (lane == 0) if off < 0 else (lane == L - 1)
        return jnp.where(bad, jnp.zeros_like(rolled), rolled)
    # Small / unaligned L: explicit zero-padded slice shift (safe for any L).
    zcol = jnp.zeros(h.shape[:-1] + (1,), h.dtype)
    if off < 0:
        return jnp.concatenate([zcol, h[..., : L + off]], axis=-1)
    return jnp.concatenate([h[..., off:], zcol], axis=-1)


def _partial_bn_stats(y):
    """Per-channel (mean over L, sum of squared deviations) for y of shape (C, L)."""
    L = y.shape[-1]
    m = jnp.sum(y, axis=-1, keepdims=True) * (1.0 / L)    # (C, 1)
    d = y - m
    m2 = jnp.sum(d * d, axis=-1, keepdims=True)           # (C, 1)
    return jnp.concatenate([m, m2], axis=-1)              # (C, 2)


def _conv3_stats_kernel(x_ref, w_ref, b_ref, y_ref, st_ref, *, compute_dtype):
    """ReLU -> Conv1d(k=3, pad=1) (+bias) and per-sample BN1 partial stats (one sample)."""
    x = x_ref[0]                                           # (C, L)
    h = jnp.maximum(x, 0.0).astype(compute_dtype)
    w0 = w_ref[0].astype(compute_dtype)                    # tap multiplying x[l-1]
    w1 = w_ref[1].astype(compute_dtype)                    # tap multiplying x[l]
    w2 = w_ref[2].astype(compute_dtype)                    # tap multiplying x[l+1]
    # Three accumulated stationary-weight matmuls; no (3C, L) operand is materialized.
    y = jnp.dot(w1, h, preferred_element_type=jnp.float32)
    y = y + jnp.dot(w0, _shifted(h, -1), preferred_element_type=jnp.float32)
    y = y + jnp.dot(w2, _shifted(h, +1), preferred_element_type=jnp.float32)
    y = y + b_ref[...]                                     # (C, 1) conv bias
    y_ref[0] = y.astype(y_ref.dtype)
    st_ref[0] = _partial_bn_stats(y)


def _bn1_relu_conv1_stats_kernel(y1_ref, w_ref, p_ref, y2_ref, st_ref, *, compute_dtype):
    """BN1 affine -> ReLU -> Conv1d(k=1) (+bias) and per-sample BN2 partial stats."""
    y1 = y1_ref[0]                                         # (C, L)
    scale1 = p_ref[:, 0:1]
    shift1 = p_ref[:, 1:2]
    b2 = p_ref[:, 2:3]
    z = jnp.maximum(y1 * scale1 + shift1, 0.0).astype(compute_dtype)
    w = w_ref[...].astype(compute_dtype)                   # (C_out, C_in), MXU-stationary
    y2 = jnp.dot(w, z, preferred_element_type=jnp.float32) + b2
    y2_ref[0] = y2.astype(y2_ref.dtype)
    st_ref[0] = _partial_bn_stats(y2)


def _bn2_residual_kernel(x_ref, y2_ref, p_ref, o_ref):
    """BN2 affine + residual add."""
    scale2 = p_ref[:, 0:1]
    shift2 = p_ref[:, 1:2]
    o_ref[0] = x_ref[0] + y2_ref[0] * scale2 + shift2


def _combine_stats(st, count_per_sample):
    """Merge per-sample (mean, M2) into global (N, L) mean / biased variance (Chan's formula)."""
    m = st[:, :, 0]                                        # (N, C) per-sample means
    m2 = st[:, :, 1]                                       # (N, C) per-sample M2
    n = st.shape[0]
    mean = jnp.mean(m, axis=0)                             # (C,)
    m2_tot = jnp.sum(m2, axis=0) + count_per_sample * jnp.sum((m - mean[None, :]) ** 2, axis=0)
    var = m2_tot / (n * count_per_sample)
    return mean, jnp.maximum(var, 0.0)


def resblock_pallas(x_ncl, params, *, use_bf16_matmul=False):
    """x_ncl: (N, C, L) float32, native PyTorch Conv1d layout (kept end-to-end)."""
    w1, b1, g1, bt1, w2, b2, g2, bt2 = params
    N, C, L = x_ncl.shape
    compute_dtype = jnp.bfloat16 if use_bf16_matmul else jnp.float32

    # Tiny wrapper-side weight packing (no activation-sized XLA ops, no transposes of x).
    w1t = jnp.transpose(w1, (2, 0, 1))                     # (3, C_out, C_in); tap k hits x[l+k-1]
    w2m = w2[:, :, 0]                                      # (C_out, C_in)
    b1c = b1.reshape(C, 1)

    vmem_params = pl.BlockSpec(memory_space=pltpu.MemorySpace.VMEM)   # whole small array in VMEM
    row_spec = pl.BlockSpec((1, C, L), lambda n: (n, 0, 0))
    st_spec = pl.BlockSpec((1, C, 2), lambda n: (n, 0, 0))
    cparams = pltpu.CompilerParams(
        dimension_semantics=("parallel",),                 # megacore / 2-TC sharding over N
        vmem_limit_bytes=_vmem_limit_bytes(),
    )
    act = jax.ShapeDtypeStruct((N, C, L), jnp.float32)
    st = jax.ShapeDtypeStruct((N, C, 2), jnp.float32)

    # --- pass 1: ReLU -> Conv1d(k=3) (+ bias), per-sample BN1 partial stats -------------
    y1, st1 = pl.pallas_call(
        functools.partial(_conv3_stats_kernel, compute_dtype=compute_dtype),
        grid=(N,),
        in_specs=[row_spec, vmem_params, vmem_params],
        out_specs=(row_spec, st_spec),
        out_shape=(act, st),
        compiler_params=cparams,
    )(x_ncl, w1t, b1c)

    mean1, var1 = _combine_stats(st1, L)                   # tiny (C,)-sized XLA ops
    scale1 = g1 * lax.rsqrt(var1 + EPS)
    p2 = jnp.stack([scale1, bt1 - mean1 * scale1, b2], axis=1)   # (C, 3)

    # --- pass 2: BN1 affine -> ReLU -> Conv1d(k=1) (+ bias), BN2 partial stats ----------
    y2, st2 = pl.pallas_call(
        functools.partial(_bn1_relu_conv1_stats_kernel, compute_dtype=compute_dtype),
        grid=(N,),
        in_specs=[row_spec, vmem_params, vmem_params],
        out_specs=(row_spec, st_spec),
        out_shape=(act, st),
        compiler_params=cparams,
    )(y1, w2m, p2)

    mean2, var2 = _combine_stats(st2, L)
    scale2 = g2 * lax.rsqrt(var2 + EPS)
    p3 = jnp.stack([scale2, bt2 - mean2 * scale2], axis=1)       # (C, 2)

    # --- pass 3: BN2 affine + residual add -----------------------------------------------
    out = pl.pallas_call(
        _bn2_residual_kernel,
        grid=(N,),
        in_specs=[row_spec, row_spec, vmem_params],
        out_specs=row_spec,
        out_shape=act,
        compiler_params=cparams,
    )(x_ncl, y2, p3)
    return out


def resblock_ref(x, params):
    """Pure-JAX reference (training-mode BN, f32-precision convs)."""
    w1, b1, g1, bt1, w2, b2, g2, bt2 = params
    dn = ('NCH', 'OIH', 'NCH')
    hi = lax.Precision.HIGHEST

    def bn(y, g, b):
        mean = y.mean(axis=(0, 2), keepdims=True)
        var = y.var(axis=(0, 2), keepdims=True)            # biased, like PyTorch BN normalization
        return (y - mean) / jnp.sqrt(var + EPS) * g[None, :, None] + b[None, :, None]

    h = jax.nn.relu(x)
    y = lax.conv_general_dilated(h, w1, (1,), ((1, 1),), dimension_numbers=dn, precision=hi)
    y = y + b1[None, :, None]
    y = jax.nn.relu(bn(y, g1, bt1))
    y = lax.conv_general_dilated(y, w2, (1,), ((0, 0),), dimension_numbers=dn, precision=hi)
    y = y + b2[None, :, None]
    y = bn(y, g2, bt2)
    return x + y


if __name__ == "__main__":
    N, dim, L = 2, 32, 16
    key = jax.random.PRNGKey(0)
    ks = jax.random.split(key, 9)

    # Deterministic synthetic parameters (PyTorch-default-like uniform bounds).
    bound1 = 1.0 / (dim * 3) ** 0.5
    bound2 = 1.0 / (dim * 1) ** 0.5
    w1 = jax.random.uniform(ks[0], (dim, dim, 3), jnp.float32, -bound1, bound1)
    b1 = jax.random.uniform(ks[1], (dim,), jnp.float32, -bound1, bound1)
    w2 = jax.random.uniform(ks[2], (dim, dim, 1), jnp.float32, -bound2, bound2)
    b2 = jax.random.uniform(ks[3], (dim,), jnp.float32, -bound2, bound2)
    g1 = jax.random.uniform(ks[4], (dim,), jnp.float32, 0.5, 1.5)
    bt1 = 0.1 * jax.random.normal(ks[5], (dim,), jnp.float32)
    g2 = jax.random.uniform(ks[6], (dim,), jnp.float32, 0.5, 1.5)
    bt2 = 0.1 * jax.random.normal(ks[7], (dim,), jnp.float32)
    params = (w1, b1, g1, bt1, w2, b2, g2, bt2)

    x = jax.random.normal(ks[8], (N, dim, L), jnp.float32)

    out = jax.block_until_ready(jax.jit(resblock_pallas)(x, params))
    ref = resblock_ref(x, params)

    assert out.shape == x.shape and out.dtype == x.dtype
    max_err = float(jnp.max(jnp.abs(out - ref)))
    assert jnp.allclose(out, ref, rtol=1e-4, atol=1e-4), f"max abs err {max_err}"
    print("KERNEL_OK")
</pallas_src>

<mosaic_0001>
module attributes {stable_mosaic.version = 11 : i64} {
  func.func @_conv3_stats_kernel(%arg0: i32, %arg1: memref<1x32x16xf32, #tpu.memory_space<vmem>>, %arg2: memref<3x32x32xf32, #tpu.memory_space<vmem>>, %arg3: memref<32x1xf32, #tpu.memory_space<vmem>>, %arg4: memref<1x32x16xf32, #tpu.memory_space<vmem>>, %arg5: memref<1x32x2xf32, #tpu.memory_space<vmem>>) attributes {dimension_semantics = [#tpu.dimension_semantics<parallel>], iteration_bounds = array<i64: 2>, scalar_prefetch = 0 : i64, scratch_operands = 0 : i64, tpu.core_type = #tpu.core_type<tc>, window_params = [{transform_indices = @transform_0, window_bounds = array<i64: 1, 32, 16>}, {pipeline_mode = #tpu.pipeline_mode<synchronous>, transform_indices = @transform_1, window_bounds = array<i64: 3, 32, 32>}, {pipeline_mode = #tpu.pipeline_mode<synchronous>, transform_indices = @transform_2, window_bounds = array<i64: 32, 1>}, {transform_indices = @transform_3, window_bounds = array<i64: 1, 32, 16>}, {transform_indices = @transform_4, window_bounds = array<i64: 1, 32, 2>}]} {
    %c0 = arith.constant 0 : index
    %c0_0 = arith.constant 0 : index
    %c0_1 = arith.constant 0 : index
    %0 = vector.load %arg1[%c0, %c0_0, %c0_1] : memref<1x32x16xf32, #tpu.memory_space<vmem>>, vector<1x32x16xf32>
    %1 = vector.shape_cast %0 : vector<1x32x16xf32> to vector<32x16xf32>
    %cst = arith.constant 0.000000e+00 : f32
    %2 = vector.broadcast %cst : f32 to vector<32x16xf32>
    %3 = arith.maximumf %1, %2 : vector<32x16xf32>
    %c0_2 = arith.constant 0 : index
    %c0_3 = arith.constant 0 : index
    %c0_4 = arith.constant 0 : index
    %4 = vector.load %arg2[%c0_2, %c0_3, %c0_4] : memref<3x32x32xf32, #tpu.memory_space<vmem>>, vector<1x32x32xf32>
    %5 = vector.shape_cast %4 : vector<1x32x32xf32> to vector<32x32xf32>
    %c1 = arith.constant 1 : index
    %c0_5 = arith.constant 0 : index
    %c0_6 = arith.constant 0 : index
    %6 = vector.load %arg2[%c1, %c0_5, %c0_6] : memref<3x32x32xf32, #tpu.memory_space<vmem>>, vector<1x32x32xf32>
    %7 = vector.shape_cast %6 : vector<1x32x32xf32> to vector<32x32xf32>
    %c2 = arith.constant 2 : index
    %c0_7 = arith.constant 0 : index
    %c0_8 = arith.constant 0 : index
    %8 = vector.load %arg2[%c2, %c0_7, %c0_8] : memref<3x32x32xf32, #tpu.memory_space<vmem>>, vector<1x32x32xf32>
    %9 = vector.shape_cast %8 : vector<1x32x32xf32> to vector<32x32xf32>
    %cst_9 = arith.constant dense<0.000000e+00> : vector<32x16xf32>
    %10 = tpu.matmul %7, %3, %cst_9 {dimension_numbers = #tpu.dot_dimension_numbers<[1], [0], [0], [1], [0, 0, 1, 1], [], []>} : vector<32x32xf32>, vector<32x16xf32>, vector<32x16xf32> -> vector<32x16xf32>
    %cst_10 = arith.constant 0.000000e+00 : f32
    %11 = vector.broadcast %cst_10 : f32 to vector<32x1xf32>
    %12 = vector.extract_strided_slice %3 {offsets = [0, 0], sizes = [32, 15], strides = [1, 1]} : vector<32x16xf32> to vector<32x15xf32>
    %13 = tpu.concatenate %11, %12 in 1 : vector<32x1xf32>, vector<32x15xf32> -> vector<32x16xf32>
    %cst_11 = arith.constant dense<0.000000e+00> : vector<32x16xf32>
    %14 = tpu.matmul %5, %13, %cst_11 {dimension_numbers = #tpu.dot_dimension_numbers<[1], [0], [0], [1], [0, 0, 1, 1], [], []>} : vector<32x32xf32>, vector<32x16xf32>, vector<32x16xf32> -> vector<32x16xf32>
    %15 = arith.addf %10, %14 : vector<32x16xf32>
    %cst_12 = arith.constant 0.000000e+00 : f32
    %16 = vector.broadcast %cst_12 : f32 to vector<32x1xf32>
    %17 = vector.extract_strided_slice %3 {offsets = [0, 1], sizes = [32, 15], strides = [1, 1]} : vector<32x16xf32> to vector<32x15xf32>
    %18 = tpu.concatenate %17, %16 in 1 : vector<32x15xf32>, vector<32x1xf32> -> vector<32x16xf32>
    %cst_13 = arith.constant dense<0.000000e+00> : vector<32x16xf32>
    %19 = tpu.matmul %9, %18, %cst_13 {dimension_numbers = #tpu.dot_dimension_numbers<[1], [0], [0], [1], [0, 0, 1, 1], [], []>} : vector<32x32xf32>, vector<32x16xf32>, vector<32x16xf32> -> vector<32x16xf32>
    %20 = arith.addf %15, %19 : vector<32x16xf32>
    %c0_14 = arith.constant 0 : index
    %c0_15 = arith.constant 0 : index
    %21 = vector.load %arg3[%c0_14, %c0_15] : memref<32x1xf32, #tpu.memory_space<vmem>>, vector<32x1xf32>
    %22 = vector.broadcast %21 : vector<32x1xf32> to vector<32x16xf32>
    %23 = arith.addf %20, %22 : vector<32x16xf32>
    %c0_16 = arith.constant 0 : index
    %c0_17 = arith.constant 0 : index
    %c0_18 = arith.constant 0 : index
    %24 = vector.load %arg4[%c0_16, %c0_17, %c0_18] : memref<1x32x16xf32, #tpu.memory_space<vmem>>, vector<1x32x16xf32>
    %25 = vector.shape_cast %24 : vector<1x32x16xf32> to vector<32x16xf32>
    %26 = vector.shape_cast %23 : vector<32x16xf32> to vector<1x32x16xf32>
    tpu.vector_store %arg4[%c0_16, %c0_17, %c0_18], %26 {strides = array<i32>} : memref<1x32x16xf32, #tpu.memory_space<vmem>>, vector<1x32x16xf32>,
    %cst_19 = arith.constant dense<0.000000e+00> : vector<32xf32>
    %27 = vector.multi_reduction <add>, %23, %cst_19 [1] : vector<32x16xf32> to vector<32xf32>
    %28 = vector.shape_cast %27 : vector<32xf32> to vector<32x1xf32>
    %cst_20 = arith.constant 6.250000e-02 : f32
    %29 = vector.broadcast %cst_20 : f32 to vector<32x1xf32>
    %30 = arith.mulf %28, %29 : vector<32x1xf32>
    %31 = vector.broadcast %30 : vector<32x1xf32> to vector<32x16xf32>
    %32 = arith.subf %23, %31 : vector<32x16xf32>
    %33 = arith.mulf %32, %32 : vector<32x16xf32>
    %cst_21 = arith.constant dense<0.000000e+00> : vector<32xf32>
    %34 = vector.multi_reduction <add>, %33, %cst_21 [1] : vector<32x16xf32> to vector<32xf32>
    %35 = vector.shape_cast %34 : vector<32xf32> to vector<32x1xf32>
    %36 = tpu.concatenate %30, %35 in 1 : vector<32x1xf32>, vector<32x1xf32> -> vector<32x2xf32>
    %c0_22 = arith.constant 0 : index
    %c0_23 = arith.constant 0 : index
    %c0_24 = arith.constant 0 : index
    %37 = vector.load %arg5[%c0_22, %c0_23, %c0_24] : memref<1x32x2xf32, #tpu.memory_space<vmem>>, vector<1x32x2xf32>
    %38 = vector.shape_cast %37 : vector<1x32x2xf32> to vector<32x2xf32>
    %39 = vector.shape_cast %36 : vector<32x2xf32> to vector<1x32x2xf32>
    tpu.vector_store %arg5[%c0_22, %c0_23, %c0_24], %39 {strides = array<i32>} : memref<1x32x2xf32, #tpu.memory_space<vmem>>, vector<1x32x2xf32>,
    return
  }
  func.func @transform_0(%arg0: i32) -> (i32, i32, i32) {
    %c0_i32 = arith.constant 0 : i32
    %c0_i32_0 = arith.constant 0 : i32
    %c0_i32_1 = arith.constant 0 : i32
    return %arg0, %c0_i32, %c0_i32_0 : i32, i32, i32
  }
  func.func @transform_1(%arg0: i32) -> (i32, i32, i32) {
    %c0_i32 = arith.constant 0 : i32
    %c0_i32_0 = arith.constant 0 : i32
    %c0_i32_1 = arith.constant 0 : i32
    %c0_i32_2 = arith.constant 0 : i32
    return %c0_i32, %c0_i32_0, %c0_i32_1 : i32, i32, i32
  }
  func.func @transform_2(%arg0: i32) -> (i32, i32) {
    %c0_i32 = arith.constant 0 : i32
    %c0_i32_0 = arith.constant 0 : i32
    %c0_i32_1 = arith.constant 0 : i32
    return %c0_i32, %c0_i32_0 : i32, i32
  }
  func.func @transform_3(%arg0: i32) -> (i32, i32, i32) {
    %c0_i32 = arith.constant 0 : i32
    %c0_i32_0 = arith.constant 0 : i32
    %c0_i32_1 = arith.constant 0 : i32
    return %arg0, %c0_i32, %c0_i32_0 : i32, i32, i32
  }
  func.func @transform_4(%arg0: i32) -> (i32, i32, i32) {
    %c0_i32 = arith.constant 0 : i32
    %c0_i32_0 = arith.constant 0 : i32
    %c0_i32_1 = arith.constant 0 : i32
    return %arg0, %c0_i32, %c0_i32_0 : i32, i32, i32
  }
}

module attributes {stable_mosaic.version = 11 : i64} {
  func.func @_bn2_residual_kernel(%arg0: i32, %arg1: memref<1x32x16xf32, #tpu.memory_space<vmem>>, %arg2: memref<1x32x16xf32, #tpu.memory_space<vmem>>, %arg3: memref<32x2xf32, #tpu.memory_space<vmem>>, %arg4: memref<1x32x16xf32, #tpu.memory_space<vmem>>) attributes {dimension_semantics = [#tpu.dimension_semantics<parallel>], iteration_bounds = array<i64: 2>, scalar_prefetch = 0 : i64, scratch_operands = 0 : i64, tpu.core_type = #tpu.core_type<tc>, window_params = [{transform_indices = @transform_0, window_bounds = array<i64: 1, 32, 16>}, {transform_indices = @transform_1, window_bounds = array<i64: 1, 32, 16>}, {pipeline_mode = #tpu.pipeline_mode<synchronous>, transform_indices = @transform_2, window_bounds = array<i64: 32, 2>}, {transform_indices = @transform_3, window_bounds = array<i64: 1, 32, 16>}]} {
    %c0 = arith.constant 0 : index
    %c0_0 = arith.constant 0 : index
    %0 = vector.load %arg3[%c0, %c0_0] : memref<32x2xf32, #tpu.memory_space<vmem>>, vector<32x1xf32>
    %c0_1 = arith.constant 0 : index
    %c1 = arith.constant 1 : index
    %1 = vector.load %arg3[%c0_1, %c1] : memref<32x2xf32, #tpu.memory_space<vmem>>, vector<32x1xf32>
    %c0_2 = arith.constant 0 : index
    %c0_3 = arith.constant 0 : index
    %c0_4 = arith.constant 0 : index
    %2 = vector.load %arg1[%c0_2, %c0_3, %c0_4] : memref<1x32x16xf32, #tpu.memory_space<vmem>>, vector<1x32x16xf32>
    %3 = vector.shape_cast %2 : vector<1x32x16xf32> to vector<32x16xf32>
    %c0_5 = arith.constant 0 : index
    %c0_6 = arith.constant 0 : index
    %c0_7 = arith.constant 0 : index
    %4 = vector.load %arg2[%c0_5, %c0_6, %c0_7] : memref<1x32x16xf32, #tpu.memory_space<vmem>>, vector<1x32x16xf32>
    %5 = vector.shape_cast %4 : vector<1x32x16xf32> to vector<32x16xf32>
    %6 = vector.broadcast %0 : vector<32x1xf32> to vector<32x16xf32>
    %7 = arith.mulf %5, %6 : vector<32x16xf32>
    %8 = arith.addf %3, %7 : vector<32x16xf32>
    %9 = vector.broadcast %1 : vector<32x1xf32> to vector<32x16xf32>
    %10 = arith.addf %8, %9 : vector<32x16xf32>
    %c0_8 = arith.constant 0 : index
    %c0_9 = arith.constant 0 : index
    %c0_10 = arith.constant 0 : index
    %11 = vector.load %arg4[%c0_8, %c0_9, %c0_10] : memref<1x32x16xf32, #tpu.memory_space<vmem>>, vector<1x32x16xf32>
    %12 = vector.shape_cast %11 : vector<1x32x16xf32> to vector<32x16xf32>
    %13 = vector.shape_cast %10 : vector<32x16xf32> to vector<1x32x16xf32>
    tpu.vector_store %arg4[%c0_8, %c0_9, %c0_10], %13 {strides = array<i32>} : memref<1x32x16xf32, #tpu.memory_space<vmem>>, vector<1x32x16xf32>,
    return
  }
  func.func @transform_0(%arg0: i32) -> (i32, i32, i32) {
    %c0_i32 = arith.constant 0 : i32
    %c0_i32_0 = arith.constant 0 : i32
    %c0_i32_1 = arith.constant 0 : i32
    return %arg0, %c0_i32, %c0_i32_0 : i32, i32, i32
  }
  func.func @transform_1(%arg0: i32) -> (i32, i32, i32) {
    %c0_i32 = arith.constant 0 : i32
    %c0_i32_0 = arith.constant 0 : i32
    %c0_i32_1 = arith.constant 0 : i32
    return %arg0, %c0_i32, %c0_i32_0 : i32, i32, i32
  }
  func.func @transform_2(%arg0: i32) -> (i32, i32) {
    %c0_i32 = arith.constant 0 : i32
    %c0_i32_0 = arith.constant 0 : i32
    %c0_i32_1 = arith.constant 0 : i32
    return %c0_i32, %c0_i32_0 : i32, i32
  }
  func.func @transform_3(%arg0: i32) -> (i32, i32, i32) {
    %c0_i32 = arith.constant 0 : i32
    %c0_i32_0 = arith.constant 0 : i32
    %c0_i32_1 = arith.constant 0 : i32
    return %arg0, %c0_i32, %c0_i32_0 : i32, i32, i32
  }
}

module attributes {stable_mosaic.version = 11 : i64} {
  func.func @_bn1_relu_conv1_stats_kernel(%arg0: i32, %arg1: memref<1x32x16xf32, #tpu.memory_space<vmem>>, %arg2: memref<32x32xf32, #tpu.memory_space<vmem>>, %arg3: memref<32x3xf32, #tpu.memory_space<vmem>>, %arg4: memref<1x32x16xf32, #tpu.memory_space<vmem>>, %arg5: memref<1x32x2xf32, #tpu.memory_space<vmem>>) attributes {dimension_semantics = [#tpu.dimension_semantics<parallel>], iteration_bounds = array<i64: 2>, scalar_prefetch = 0 : i64, scratch_operands = 0 : i64, tpu.core_type = #tpu.core_type<tc>, window_params = [{transform_indices = @transform_0, window_bounds = array<i64: 1, 32, 16>}, {pipeline_mode = #tpu.pipeline_mode<synchronous>, transform_indices = @transform_1, window_bounds = array<i64: 32, 32>}, {pipeline_mode = #tpu.pipeline_mode<synchronous>, transform_indices = @transform_2, window_bounds = array<i64: 32, 3>}, {transform_indices = @transform_3, window_bounds = array<i64: 1, 32, 16>}, {transform_indices = @transform_4, window_bounds = array<i64: 1, 32, 2>}]} {
    %c0 = arith.constant 0 : index
    %c0_0 = arith.constant 0 : index
    %c0_1 = arith.constant 0 : index
    %0 = vector.load %arg1[%c0, %c0_0, %c0_1] : memref<1x32x16xf32, #tpu.memory_space<vmem>>, vector<1x32x16xf32>
    %1 = vector.shape_cast %0 : vector<1x32x16xf32> to vector<32x16xf32>
    %c0_2 = arith.constant 0 : index
    %c0_3 = arith.constant 0 : index
    %2 = vector.load %arg3[%c0_2, %c0_3] : memref<32x3xf32, #tpu.memory_space<vmem>>, vector<32x1xf32>
    %c0_4 = arith.constant 0 : index
    %c1 = arith.constant 1 : index
    %3 = vector.load %arg3[%c0_4, %c1] : memref<32x3xf32, #tpu.memory_space<vmem>>, vector<32x1xf32>
    %c0_5 = arith.constant 0 : index
    %c2 = arith.constant 2 : index
    %4 = vector.load %arg3[%c0_5, %c2] : memref<32x3xf32, #tpu.memory_space<vmem>>, vector<32x1xf32>
    %5 = vector.broadcast %2 : vector<32x1xf32> to vector<32x16xf32>
    %6 = arith.mulf %1, %5 : vector<32x16xf32>
    %7 = vector.broadcast %3 : vector<32x1xf32> to vector<32x16xf32>
    %8 = arith.addf %6, %7 : vector<32x16xf32>
    %cst = arith.constant 0.000000e+00 : f32
    %9 = vector.broadcast %cst : f32 to vector<32x16xf32>
    %10 = arith.maximumf %8, %9 : vector<32x16xf32>
    %c0_6 = arith.constant 0 : index
    %c0_7 = arith.constant 0 : index
    %11 = vector.load %arg2[%c0_6, %c0_7] : memref<32x32xf32, #tpu.memory_space<vmem>>, vector<32x32xf32>
    %cst_8 = arith.constant dense<0.000000e+00> : vector<32x16xf32>
    %12 = tpu.matmul %11, %10, %cst_8 {dimension_numbers = #tpu.dot_dimension_numbers<[1], [0], [0], [1], [0, 0, 1, 1], [], []>} : vector<32x32xf32>, vector<32x16xf32>, vector<32x16xf32> -> vector<32x16xf32>
    %13 = vector.broadcast %4 : vector<32x1xf32> to vector<32x16xf32>
    %14 = arith.addf %12, %13 : vector<32x16xf32>
    %c0_9 = arith.constant 0 : index
    %c0_10 = arith.constant 0 : index
    %c0_11 = arith.constant 0 : index
    %15 = vector.load %arg4[%c0_9, %c0_10, %c0_11] : memref<1x32x16xf32, #tpu.memory_space<vmem>>, vector<1x32x16xf32>
    %16 = vector.shape_cast %15 : vector<1x32x16xf32> to vector<32x16xf32>
    %17 = vector.shape_cast %14 : vector<32x16xf32> to vector<1x32x16xf32>
    tpu.vector_store %arg4[%c0_9, %c0_10, %c0_11], %17 {strides = array<i32>} : memref<1x32x16xf32, #tpu.memory_space<vmem>>, vector<1x32x16xf32>,
    %cst_12 = arith.constant dense<0.000000e+00> : vector<32xf32>
    %18 = vector.multi_reduction <add>, %14, %cst_12 [1] : vector<32x16xf32> to vector<32xf32>
    %19 = vector.shape_cast %18 : vector<32xf32> to vector<32x1xf32>
    %cst_13 = arith.constant 6.250000e-02 : f32
    %20 = vector.broadcast %cst_13 : f32 to vector<32x1xf32>
    %21 = arith.mulf %19, %20 : vector<32x1xf32>
    %22 = vector.broadcast %21 : vector<32x1xf32> to vector<32x16xf32>
    %23 = arith.subf %14, %22 : vector<32x16xf32>
    %24 = arith.mulf %23, %23 : vector<32x16xf32>
    %cst_14 = arith.constant dense<0.000000e+00> : vector<32xf32>
    %25 = vector.multi_reduction <add>, %24, %cst_14 [1] : vector<32x16xf32> to vector<32xf32>
    %26 = vector.shape_cast %25 : vector<32xf32> to vector<32x1xf32>
    %27 = tpu.concatenate %21, %26 in 1 : vector<32x1xf32>, vector<32x1xf32> -> vector<32x2xf32>
    %c0_15 = arith.constant 0 : index
    %c0_16 = arith.constant 0 : index
    %c0_17 = arith.constant 0 : index
    %28 = vector.load %arg5[%c0_15, %c0_16, %c0_17] : memref<1x32x2xf32, #tpu.memory_space<vmem>>, vector<1x32x2xf32>
    %29 = vector.shape_cast %28 : vector<1x32x2xf32> to vector<32x2xf32>
    %30 = vector.shape_cast %27 : vector<32x2xf32> to vector<1x32x2xf32>
    tpu.vector_store %arg5[%c0_15, %c0_16, %c0_17], %30 {strides = array<i32>} : memref<1x32x2xf32, #tpu.memory_space<vmem>>, vector<1x32x2xf32>,
    return
  }
  func.func @transform_0(%arg0: i32) -> (i32, i32, i32) {
    %c0_i32 = arith.constant 0 : i32
    %c0_i32_0 = arith.constant 0 : i32
    %c0_i32_1 = arith.constant 0 : i32
    return %arg0, %c0_i32, %c0_i32_0 : i32, i32, i32
  }
  func.func @transform_1(%arg0: i32) -> (i32, i32) {
    %c0_i32 = arith.constant 0 : i32
    %c0_i32_0 = arith.constant 0 : i32
    %c0_i32_1 = arith.constant 0 : i32
    return %c0_i32, %c0_i32_0 : i32, i32
  }
  func.func @transform_2(%arg0: i32) -> (i32, i32) {
    %c0_i32 = arith.constant 0 : i32
    %c0_i32_0 = arith.constant 0 : i32
    %c0_i32_1 = arith.constant 0 : i32
    return %c0_i32, %c0_i32_0 : i32, i32
  }
  func.func @transform_3(%arg0: i32) -> (i32, i32, i32) {
    %c0_i32 = arith.constant 0 : i32
    %c0_i32_0 = arith.constant 0 : i32
    %c0_i32_1 = arith.constant 0 : i32
    return %arg0, %c0_i32, %c0_i32_0 : i32, i32, i32
  }
  func.func @transform_4(%arg0: i32) -> (i32, i32, i32) {
    %c0_i32 = arith.constant 0 : i32
    %c0_i32_0 = arith.constant 0 : i32
    %c0_i32_1 = arith.constant 0 : i32
    return %arg0, %c0_i32, %c0_i32_0 : i32, i32, i32
  }
}

</mosaic_0001>

<llo_original>
// kernel: resblock_pallas.5
$region0: #{resblock_pallas.5}
  #allocation0 [shape = 'u32[]', space=smem, size = 0x4, offset = 0x4, fixed_abs, tag = 'smem constant byte address 0x4 - core index']
  #allocation1 [shape = 'u32[144,128]{1,0:T(1,128)}', space=vmem, size = 0x12000, scoped, tag = 'internal scratch']
  %s0 = inlined_call_operand.vmem [shape: f32[2,32,16], index: 0, kind: input, shape index: {}]
  %s1 = inlined_call_operand.vmem [shape: f32[2,32,16], index: 1, kind: input, shape index: {}]
  %s2 = inlined_call_operand.vmem [shape: f32[32,2], index: 2, kind: input, shape index: {}]
  %s3 = inlined_call_operand.vmem [shape: f32[2,32,16], index: 3, kind: output, shape index: {}]
  %s4 = sld [smem:[#allocation0]]
  $region45: #{resblock_pallas.5} parent=0
    _
  %s6 = ssub.s32 1, %s4
  %s7 = scalar_select 0, %s6, %s4
  loop: start=0, step=1, limit=4
  $region2: #{resblock_pallas.5} parent=0 // loop_pre_header
    _
  $region3: #{resblock_pallas.5} parent=0 // loop_header
    %s9 = sphi 0, %s13
    %p10 = scmp.ge.s32.totalorder %s9, 4
    %s19 = sphi 0, %s21
    %s22 = sphi 0, %s19
    %s23 = sphi 0, %s22
    %s39 = sphi 0, %s23
    %s45 = sphi 0, %s47
    %s48 = sphi 0, %s45
    %s49 = sphi 0, %s48
    %s65 = sphi 0, %s49
    %s69 = sphi 0, %s69
    %s71 = sphi 0, %s69
    %s72 = sphi 0, %s71
    %s86 = sphi 0, %s72
    %s92 = sphi 0, %s94
    %s95 = sphi 0, %s92
    %s96 = sphi 0, %s95
    %s112 = sphi 0, %s96
  $region4: #{resblock_pallas.5} parent=0 // loop_header_branch
    %12 = sbr.rel (%p10) target = $region8
  $region5: #{resblock_pallas.5} parent=0 // loop_body
    %s14 = ssub.s32 %s9, 1
    %s15 = ssub.s32 %s9, 2
    %s16 = sadd.s32 %s9, 1
    %s17 = ssub.s32 %s9, %s16
    %p18 = scmp.eq.s32.totalorder %s17, 0
    %s20 = sadd.s32 %s19, 1
    %s21 = scalar_select %p18, %s19, %s20
    %p24 = pneg %p18
    %p25 = scmp.eq.s32.totalorder %s9, 1
    %p26 = por %p24, %p25
    %p27 = scmp.ne.s32.totalorder %s19, %s22
    %p28 = scmp.eq.s32.totalorder %s9, 0
    %p29 = por %p27, %p28
    %p30 = scmp.ne.s32.totalorder %s19, %s22
    %p31 = scmp.eq.s32.totalorder %s14, 1
    %p32 = por %p30, %p31
    %p33 = scmp.ne.s32.totalorder %s22, %s23
    %p34 = scmp.eq.s32.totalorder %s14, 0
    %p35 = por %p33, %p34
    %p36 = scmp.ne.s32.totalorder %s22, %s23
    %p37 = scmp.eq.s32.totalorder %s15, 1
    %p38 = por %p36, %p37
    %p40 = scmp.ne.s32.totalorder %s23, %s39
    %p41 = scmp.eq.s32.totalorder %s15, 0
    %p42 = por %p40, %p41
    %s43 = ssub.s32 %s9, %s16
    %p44 = scmp.eq.s32.totalorder %s43, 0
    %s46 = sadd.s32 %s45, 1
    %s47 = scalar_select %p44, %s45, %s46
    %p50 = pneg %p44
    %p51 = scmp.eq.s32.totalorder %s9, 1
    %p52 = por %p50, %p51
    %p53 = scmp.ne.s32.totalorder %s45, %s48
    %p54 = scmp.eq.s32.totalorder %s9, 0
    %p55 = por %p53, %p54
    %p56 = scmp.ne.s32.totalorder %s45, %s48
    %p57 = scmp.eq.s32.totalorder %s14, 1
    %p58 = por %p56, %p57
    %p59 = scmp.ne.s32.totalorder %s48, %s49
    %p60 = scmp.eq.s32.totalorder %s14, 0
    %p61 = por %p59, %p60
    %p62 = scmp.ne.s32.totalorder %s48, %s49
    %p63 = scmp.eq.s32.totalorder %s15, 1
    %p64 = por %p62, %p63
    %p66 = scmp.ne.s32.totalorder %s49, %s65
    %p67 = scmp.eq.s32.totalorder %s15, 0
    %p68 = por %p66, %p67
    %s70 = sadd.s32 %s69, 1
    %p73 = scmp.eq.s32.totalorder %s9, 1
    %p74 = scmp.ne.s32.totalorder %s69, %s71
    %p75 = scmp.eq.s32.totalorder %s9, 0
    %p76 = por %p74, %p75
    %p77 = scmp.ne.s32.totalorder %s69, %s71
    %p78 = scmp.eq.s32.totalorder %s14, 1
    %p79 = por %p77, %p78
    %p80 = scmp.ne.s32.totalorder %s71, %s72
    %p81 = scmp.eq.s32.totalorder %s14, 0
    %p82 = por %p80, %p81
    %p83 = scmp.ne.s32.totalorder %s71, %s72
    %p84 = scmp.eq.s32.totalorder %s15, 1
    %p85 = por %p83, %p84
    %p87 = scmp.ne.s32.totalorder %s72, %s86
    %p88 = scmp.eq.s32.totalorder %s15, 0
    %p89 = por %p87, %p88
    %s90 = ssub.s32 %s9, %s16
    %p91 = scmp.eq.s32.totalorder %s90, 0
    %s93 = sadd.s32 %s92, 1
    %s94 = scalar_select %p91, %s92, %s93
    %p97 = pneg %p91
    %p98 = scmp.eq.s32.totalorder %s9, 1
    %p99 = por %p97, %p98
    %p100 = scmp.ne.s32.totalorder %s92, %s95
    %p101 = scmp.eq.s32.totalorder %s9, 0
    %p102 = por %p100, %p101
    %p103 = scmp.ne.s32.totalorder %s92, %s95
    %p104 = scmp.eq.s32.totalorder %s14, 1
    %p105 = por %p103, %p104
    %p106 = scmp.ne.s32.totalorder %s95, %s96
    %p107 = scmp.eq.s32.totalorder %s14, 0
    %p108 = por %p106, %p107
    %p109 = scmp.ne.s32.totalorder %s95, %s96
    %p110 = scmp.eq.s32.totalorder %s15, 1
    %p111 = por %p109, %p110
    %p113 = scmp.ne.s32.totalorder %s96, %s112
    %p114 = scmp.eq.s32.totalorder %s15, 0
    %p115 = por %p113, %p114
    %p116 = scmp.le.s32.totalorder 1, %s9
    %p117 = scmp.lt.s32.totalorder %s9, 3
    %p118 = pnand %p116, %p117
    %p119 = pneg %p118
    // Predicated region
    $region9: #{resblock_pallas.5} parent=5 // pred_check
      _
    $region10: #{resblock_pallas.5} parent=5 // pred_check_branch
      %121 = sbr.rel (%p118) target = $region12
    $region11: #{resblock_pallas.5} parent=5 // pred_region
      %s122 = ssub.s32 %s9, 1
      // Predicated region
      $region13: #{resblock_pallas.5} parent=11 // pred_check
        %p123 = pneg %p82
      $region14: #{resblock_pallas.5} parent=11 // pred_check_branch
        %125 = sbr.rel (%p123) target = $region16
      $region15: #{resblock_pallas.5} parent=11 // pred_region
        _
      $region16: #{resblock_pallas.5} parent=11 // pred_fallthru
        _
    $region12: #{resblock_pallas.5} parent=5 // pred_fallthru
      _
    %p126 = scmp.lt.s32.totalorder %s9, 2
    // Predicated region
    $region17: #{resblock_pallas.5} parent=5 // pred_check
      %p127 = pneg %p126
    $region18: #{resblock_pallas.5} parent=5 // pred_check_branch
      %129 = sbr.rel (%p127) target = $region20
    $region19: #{resblock_pallas.5} parent=5 // pred_region
      // Predicated region
      $region21: #{resblock_pallas.5} parent=19 // pred_check
        %p130 = pneg %p29
      $region22: #{resblock_pallas.5} parent=19 // pred_check_branch
        %132 = sbr.rel (%p130) target = $region24
      $region23: #{resblock_pallas.5} parent=19 // pred_region
        %p133 = scmp.lt.s32.totalorder %s9, 1
        %s134 = scalar_select %p133, %s9, 1
        %s135 = smul.addr %s134, 4
        %s136 = smul.addr %s135, 8
        %s137 = scalar_lea.vmem %s0, %s136
      $region24: #{resblock_pallas.5} parent=19 // pred_fallthru
        _
      // Predicated region
      $region25: #{resblock_pallas.5} parent=19 // pred_check
        %p138 = pneg %p55
      $region26: #{resblock_pallas.5} parent=19 // pred_check_branch
        %140 = sbr.rel (%p138) target = $region28
      $region27: #{resblock_pallas.5} parent=19 // pred_region
        %p141 = scmp.lt.s32.totalorder %s9, 1
        %s142 = scalar_select %p141, %s9, 1
        %s143 = smul.addr %s142, 4
        %s144 = smul.addr %s143, 8
        %s145 = scalar_lea.vmem %s1, %s144
      $region28: #{resblock_pallas.5} parent=19 // pred_fallthru
        _
    $region20: #{resblock_pallas.5} parent=5 // pred_fallthru
      _
    %p146 = scmp.le.s32.totalorder 1, %s9
    %p147 = scmp.lt.s32.totalorder %s9, 3
    %p148 = pnand %p146, %p147
    %p149 = pneg %p148
    // Predicated region
    $region29: #{resblock_pallas.5} parent=5 // pred_check
      _
    $region30: #{resblock_pallas.5} parent=5 // pred_check_branch
      %151 = sbr.rel (%p148) target = $region32
    $region31: #{resblock_pallas.5} parent=5 // pred_region
      %s152 = ssub.s32 %s9, 1
      %p153 = scmp.lt.s32.totalorder %s14, 1
      %s154 = scalar_select %p153, %s14, 1
      %s155 = smul.addr %s154, 4
      %s156 = smul.addr %s155, 8
      %s157 = scalar_lea.vmem %s0, %s156
      %p158 = pneg %p35
      %p159 = pneg %p32
      %p160 = scmp.lt.s32.totalorder %s14, 1
      %s161 = scalar_select %p160, %s14, 1
      %s162 = smul.addr %s161, 4
      %s163 = smul.addr %s162, 8
      %s164 = scalar_lea.vmem %s1, %s163
      %p165 = pneg %p61
      %p166 = pneg %p58
      %p167 = pneg %p82
      %p168 = pneg %p79
      %p169 = pneg %p108
      %p170 = pneg %p105
      %p171 = scmp.lt.s32.totalorder %s14, 1
      %s172 = scalar_select %p171, %s14, 1
      %s173 = smul.addr %s172, 4
      %s174 = smul.addr %s173, 8
      %s175 = scalar_lea.vmem %s3, %s174
      %p176 = scmp.lt.s32.totalorder %s14, 1
      %s177 = scalar_select %p176, %s14, 1
      %s178 = smul.addr %s177, 4
      %s179 = smul.addr %s178, 8
      %s180 = scalar_lea.vmem %s0, %s179
      %p181 = scmp.lt.s32.totalorder %s14, 1
      %s182 = scalar_select %p181, %s14, 1
      %s183 = smul.addr %s182, 4
      %s184 = smul.addr %s183, 8
      %s185 = scalar_lea.vmem %s1, %s184
      %p186 = scmp.lt.s32.totalorder %s14, 1
      %s187 = scalar_select %p186, %s14, 1
      %s188 = smul.addr %s187, 4
      %s189 = smul.addr %s188, 8
      %s190 = scalar_lea.vmem %s3, %s189
      %v191 = vld [vmem:[%s2] sm:$0xff]
      %v192 = vld [vmem:[%s2 + $0x8] sm:$0xff]
      %v193 = vld [vmem:[%s2 + $0x10] sm:$0xff]
      %v194 = vld [vmem:[%s2 + $0x18] sm:$0xff]
      %v195 = vld [vmem:[%s180] sm:$0xff]
      %v196 = vld [vmem:[%s180 + $0x8] sm:$0xff]
      %v197 = vld [vmem:[%s180 + $0x10] sm:$0xff]
      %v198 = vld [vmem:[%s180 + $0x18] sm:$0xff]
      %v199 = vld [vmem:[%s185] sm:$0xff]
      %v200 = vld [vmem:[%s185 + $0x8] sm:$0xff]
      %v201 = vld [vmem:[%s185 + $0x10] sm:$0xff]
      %v202 = vld [vmem:[%s185 + $0x18] sm:$0xff]
      %204 = vset.pattern.permute.xlu0 0
      %205 = vperm.xlu0 %204, %v191
      %v206 = vpop.permute.xlu0 %205
      %209 = vset.pattern.permute.xlu0 0
      %210 = vperm.xlu0 %209, %v192
      %v211 = vpop.permute.xlu0 %210
      %214 = vset.pattern.permute.xlu0 0
      %215 = vperm.xlu0 %214, %v193
      %v216 = vpop.permute.xlu0 %215
      %219 = vset.pattern.permute.xlu0 0
      %220 = vperm.xlu0 %219, %v194
      %v221 = vpop.permute.xlu0 %220
      %v223 = vmul.f32 %v199, %v206
      %v224 = vmul.f32 %v200, %v211
      %v225 = vmul.f32 %v201, %v216
      %v226 = vmul.f32 %v202, %v221
      %v227 = vadd.f32 %v195, %v223
      %v228 = vadd.f32 %v196, %v224
      %v229 = vadd.f32 %v197, %v225
      %v230 = vadd.f32 %v198, %v226
      %231 = vset.pattern.permute.xlu0 1
      %232 = vperm.xlu0 %231, %v191
      %v233 = vpop.permute.xlu0 %232
      %235 = vset.pattern.permute.xlu0 1
      %236 = vperm.xlu0 %235, %v192
      %v237 = vpop.permute.xlu0 %236
      %239 = vset.pattern.permute.xlu0 1
      %240 = vperm.xlu0 %239, %v193
      %v241 = vpop.permute.xlu0 %240
      %243 = vset.pattern.permute.xlu0 1
      %244 = vperm.xlu0 %243, %v194
      %v245 = vpop.permute.xlu0 %244
      %v247 = vadd.f32 %v227, %v233
      %v248 = vadd.f32 %v228, %v237
      %v249 = vadd.f32 %v229, %v241
      %v250 = vadd.f32 %v230, %v245
      %vm251 = vcmask 130048
      %252 = vst.msk [vmem:[%s190] sm:$0xff] %vm251, %v247
      %253 = vst.msk [vmem:[%s190 + $0x8] sm:$0xff] %vm251, %v248
      %254 = vst.msk [vmem:[%s190 + $0x10] sm:$0xff] %vm251, %v249
      %255 = vst.msk [vmem:[%s190 + $0x18] sm:$0xff] %vm251, %v250
      %p256 = scmp.lt.s32.totalorder %s14, 1
      %s257 = scalar_select %p256, %s14, 1
      %s258 = smul.addr %s257, 4
      %s259 = smul.addr %s258, 8
      %s260 = scalar_lea.vmem %s3, %s259
      // Predicated region
      $region33: #{resblock_pallas.5} parent=31 // pred_check
        %p261 = pneg %p105
      $region34: #{resblock_pallas.5} parent=31 // pred_check_branch
        %263 = sbr.rel (%p261) target = $region36
      $region35: #{resblock_pallas.5} parent=31 // pred_region
        _
      $region36: #{resblock_pallas.5} parent=31 // pred_fallthru
        _
    $region32: #{resblock_pallas.5} parent=5 // pred_fallthru
      _
    %p264 = scmp.le.s32.totalorder 2, %s9
    // Predicated region
    $region37: #{resblock_pallas.5} parent=5 // pred_check
      %p265 = pneg %p264
    $region38: #{resblock_pallas.5} parent=5 // pred_check_branch
      %267 = sbr.rel (%p265) target = $region40
    $region39: #{resblock_pallas.5} parent=5 // pred_region
      %s268 = ssub.s32 %s9, 2
      // Predicated region
      $region41: #{resblock_pallas.5} parent=39 // pred_check
        %p269 = pneg %p111
      $region42: #{resblock_pallas.5} parent=39 // pred_check_branch
        %271 = sbr.rel (%p269) target = $region44
      $region43: #{resblock_pallas.5} parent=39 // pred_region
        %p272 = scmp.lt.s32.totalorder %s15, 1
        %s273 = scalar_select %p272, %s15, 1
        %s274 = smul.addr %s273, 4
        %s275 = smul.addr %s274, 8
        %s276 = scalar_lea.vmem %s3, %s275
      $region44: #{resblock_pallas.5} parent=39 // pred_fallthru
        _
    $region40: #{resblock_pallas.5} parent=5 // pred_fallthru
      _
  $region6: #{resblock_pallas.5} parent=0 // loop_footer
    %s13 = sadd.s32 1, %s9
  $region7: #{resblock_pallas.5} parent=0 // loop_footer_branch
    %8 = sbr.rel target = $region3
  $region8: #{resblock_pallas.5} parent=0 // loop_exit
    _

// kernel: resblock_pallas.3
$region0: #{resblock_pallas.3}
  #allocation0 [shape = 'u32[]', space=smem, size = 0x4, offset = 0x4, fixed_abs, tag = 'smem constant byte address 0x4 - core index']
  #allocation1 [shape = 'u32[144,128]{1,0:T(1,128)}', space=vmem, size = 0x12000, scoped, tag = 'internal scratch']
  %s0 = inlined_call_operand.vmem [shape: f32[2,32,16], index: 0, kind: input, shape index: {}]
  %s1 = inlined_call_operand.vmem [shape: f32[3,32,32], index: 1, kind: input, shape index: {}]
  %s2 = inlined_call_operand.vmem [shape: f32[32,1], index: 2, kind: input, shape index: {}]
  %s3 = inlined_call_operand.vmem [shape: f32[2,32,16], index: 3, kind: output, shape index: {0}]
  %s4 = inlined_call_operand.vmem [shape: f32[2,32,2], index: 4, kind: output, shape index: {1}]
  %5 = xla_tuple %s3, %s4
  %s6 = sld [smem:[#allocation0]]
  $region53: #{resblock_pallas.3} parent=0
    _
  %s8 = ssub.s32 1, %s6
  %s9 = scalar_select 0, %s8, %s6
  loop: start=0, step=1, limit=4
  $region2: #{resblock_pallas.3} parent=0 // loop_pre_header
    _
  $region3: #{resblock_pallas.3} parent=0 // loop_header
    %s11 = sphi 0, %s15
    %p12 = scmp.ge.s32.totalorder %s11, 4
    %s21 = sphi 0, %s23
    %s24 = sphi 0, %s21
    %s25 = sphi 0, %s24
    %s41 = sphi 0, %s25
    %s45 = sphi 0, %s45
    %s47 = sphi 0, %s45
    %s48 = sphi 0, %s47
    %s62 = sphi 0, %s48
    %s66 = sphi 0, %s66
    %s68 = sphi 0, %s66
    %s69 = sphi 0, %s68
    %s83 = sphi 0, %s69
    %s89 = sphi 0, %s91
    %s92 = sphi 0, %s89
    %s93 = sphi 0, %s92
    %s109 = sphi 0, %s93
    %s115 = sphi 0, %s117
    %s118 = sphi 0, %s115
    %s119 = sphi 0, %s118
    %s135 = sphi 0, %s119
  $region4: #{resblock_pallas.3} parent=0 // loop_header_branch
    %14 = sbr.rel (%p12) target = $region8
  $region5: #{resblock_pallas.3} parent=0 // loop_body
    %s16 = ssub.s32 %s11, 1
    %s17 = ssub.s32 %s11, 2
    %s18 = sadd.s32 %s11, 1
    %s19 = ssub.s32 %s11, %s18
    %p20 = scmp.eq.s32.totalorder %s19, 0
    %s22 = sadd.s32 %s21, 1
    %s23 = scalar_select %p20, %s21, %s22
    %p26 = pneg %p20
    %p27 = scmp.eq.s32.totalorder %s11, 1
    %p28 = por %p26, %p27
    %p29 = scmp.ne.s32.totalorder %s21, %s24
    %p30 = scmp.eq.s32.totalorder %s11, 0
    %p31 = por %p29, %p30
    %p32 = scmp.ne.s32.totalorder %s21, %s24
    %p33 = scmp.eq.s32.totalorder %s16, 1
    %p34 = por %p32, %p33
    %p35 = scmp.ne.s32.totalorder %s24, %s25
    %p36 = scmp.eq.s32.totalorder %s16, 0
    %p37 = por %p35, %p36
    %p38 = scmp.ne.s32.totalorder %s24, %s25
    %p39 = scmp.eq.s32.totalorder %s17, 1
    %p40 = por %p38, %p39
    %p42 = scmp.ne.s32.totalorder %s25, %s41
    %p43 = scmp.eq.s32.totalorder %s17, 0
    %p44 = por %p42, %p43
    %s46 = sadd.s32 %s45, 1
    %p49 = scmp.eq.s32.totalorder %s11, 1
    %p50 = scmp.ne.s32.totalorder %s45, %s47
    %p51 = scmp.eq.s32.totalorder %s11, 0
    %p52 = por %p50, %p51
    %p53 = scmp.ne.s32.totalorder %s45, %s47
    %p54 = scmp.eq.s32.totalorder %s16, 1
    %p55 = por %p53, %p54
    %p56 = scmp.ne.s32.totalorder %s47, %s48
    %p57 = scmp.eq.s32.totalorder %s16, 0
    %p58 = por %p56, %p57
    %p59 = scmp.ne.s32.totalorder %s47, %s48
    %p60 = scmp.eq.s32.totalorder %s17, 1
    %p61 = por %p59, %p60
    %p63 = scmp.ne.s32.totalorder %s48, %s62
    %p64 = scmp.eq.s32.totalorder %s17, 0
    %p65 = por %p63, %p64
    %s67 = sadd.s32 %s66, 1
    %p70 = scmp.eq.s32.totalorder %s11, 1
    %p71 = scmp.ne.s32.totalorder %s66, %s68
    %p72 = scmp.eq.s32.totalorder %s11, 0
    %p73 = por %p71, %p72
    %p74 = scmp.ne.s32.totalorder %s66, %s68
    %p75 = scmp.eq.s32.totalorder %s16, 1
    %p76 = por %p74, %p75
    %p77 = scmp.ne.s32.totalorder %s68, %s69
    %p78 = scmp.eq.s32.totalorder %s16, 0
    %p79 = por %p77, %p78
    %p80 = scmp.ne.s32.totalorder %s68, %s69
    %p81 = scmp.eq.s32.totalorder %s17, 1
    %p82 = por %p80, %p81
    %p84 = scmp.ne.s32.totalorder %s69, %s83
    %p85 = scmp.eq.s32.totalorder %s17, 0
    %p86 = por %p84, %p85
    %s87 = ssub.s32 %s11, %s18
    %p88 = scmp.eq.s32.totalorder %s87, 0
    %s90 = sadd.s32 %s89, 1
    %s91 = scalar_select %p88, %s89, %s90
    %p94 = pneg %p88
    %p95 = scmp.eq.s32.totalorder %s11, 1
    %p96 = por %p94, %p95
    %p97 = scmp.ne.s32.totalorder %s89, %s92
    %p98 = scmp.eq.s32.totalorder %s11, 0
    %p99 = por %p97, %p98
    %p100 = scmp.ne.s32.totalorder %s89, %s92
    %p101 = scmp.eq.s32.totalorder %s16, 1
    %p102 = por %p100, %p101
    %p103 = scmp.ne.s32.totalorder %s92, %s93
    %p104 = scmp.eq.s32.totalorder %s16, 0
    %p105 = por %p103, %p104
    %p106 = scmp.ne.s32.totalorder %s92, %s93
    %p107 = scmp.eq.s32.totalorder %s17, 1
    %p108 = por %p106, %p107
    %p110 = scmp.ne.s32.totalorder %s93, %s109
    %p111 = scmp.eq.s32.totalorder %s17, 0
    %p112 = por %p110, %p111
    %s113 = ssub.s32 %s11, %s18
    %p114 = scmp.eq.s32.totalorder %s113, 0
    %s116 = sadd.s32 %s115, 1
    %s117 = scalar_select %p114, %s115, %s116
    %p120 = pneg %p114
    %p121 = scmp.eq.s32.totalorder %s11, 1
    %p122 = por %p120, %p121
    %p123 = scmp.ne.s32.totalorder %s115, %s118
    %p124 = scmp.eq.s32.totalorder %s11, 0
    %p125 = por %p123, %p124
    %p126 = scmp.ne.s32.totalorder %s115, %s118
    %p127 = scmp.eq.s32.totalorder %s16, 1
    %p128 = por %p126, %p127
    %p129 = scmp.ne.s32.totalorder %s118, %s119
    %p130 = scmp.eq.s32.totalorder %s16, 0
    %p131 = por %p129, %p130
    %p132 = scmp.ne.s32.totalorder %s118, %s119
    %p133 = scmp.eq.s32.totalorder %s17, 1
    %p134 = por %p132, %p133
    %p136 = scmp.ne.s32.totalorder %s119, %s135
    %p137 = scmp.eq.s32.totalorder %s17, 0
    %p138 = por %p136, %p137
    %p139 = scmp.le.s32.totalorder 1, %s11
    %p140 = scmp.lt.s32.totalorder %s11, 3
    %p141 = pnand %p139, %p140
    %p142 = pneg %p141
    // Predicated region
    $region9: #{resblock_pallas.3} parent=5 // pred_check
      _
    $region10: #{resblock_pallas.3} parent=5 // pred_check_branch
      %144 = sbr.rel (%p141) target = $region12
    $region11: #{resblock_pallas.3} parent=5 // pred_region
      %s145 = ssub.s32 %s11, 1
      // Predicated region
      $region13: #{resblock_pallas.3} parent=11 // pred_check
        %p146 = pneg %p58
      $region14: #{resblock_pallas.3} parent=11 // pred_check_branch
        %148 = sbr.rel (%p146) target = $region16
      $region15: #{resblock_pallas.3} parent=11 // pred_region
        _
      $region16: #{resblock_pallas.3} parent=11 // pred_fallthru
        _
      // Predicated region
      $region17: #{resblock_pallas.3} parent=11 // pred_check
        %p149 = pneg %p79
      $region18: #{resblock_pallas.3} parent=11 // pred_check_branch
        %151 = sbr.rel (%p149) target = $region20
      $region19: #{resblock_pallas.3} parent=11 // pred_region
        _
      $region20: #{resblock_pallas.3} parent=11 // pred_fallthru
        _
    $region12: #{resblock_pallas.3} parent=5 // pred_fallthru
      _
    %p152 = scmp.lt.s32.totalorder %s11, 2
    // Predicated region
    $region21: #{resblock_pallas.3} parent=5 // pred_check
      %p153 = pneg %p152
    $region22: #{resblock_pallas.3} parent=5 // pred_check_branch
      %155 = sbr.rel (%p153) target = $region24
    $region23: #{resblock_pallas.3} parent=5 // pred_region
      // Predicated region
      $region25: #{resblock_pallas.3} parent=23 // pred_check
        %p156 = pneg %p31
      $region26: #{resblock_pallas.3} parent=23 // pred_check_branch
        %158 = sbr.rel (%p156) target = $region28
      $region27: #{resblock_pallas.3} parent=23 // pred_region
        %p159 = scmp.lt.s32.totalorder %s11, 1
        %s160 = scalar_select %p159, %s11, 1
        %s161 = smul.addr %s160, 4
        %s162 = smul.addr %s161, 8
        %s163 = scalar_lea.vmem %s0, %s162
      $region28: #{resblock_pallas.3} parent=23 // pred_fallthru
        _
    $region24: #{resblock_pallas.3} parent=5 // pred_fallthru
      _
    %p164 = scmp.le.s32.totalorder 1, %s11
    %p165 = scmp.lt.s32.totalorder %s11, 3
    %p166 = pnand %p164, %p165
    %p167 = pneg %p166
    // Predicated region
    $region29: #{resblock_pallas.3} parent=5 // pred_check
      _
    $region30: #{resblock_pallas.3} parent=5 // pred_check_branch
      %169 = sbr.rel (%p166) target = $region32
    $region31: #{resblock_pallas.3} parent=5 // pred_region
      %s170 = ssub.s32 %s11, 1
      %p171 = scmp.lt.s32.totalorder %s16, 1
      %s172 = scalar_select %p171, %s16, 1
      %s173 = smul.addr %s172, 4
      %s174 = smul.addr %s173, 8
      %s175 = scalar_lea.vmem %s0, %s174
      %p176 = pneg %p37
      %p177 = pneg %p34
      %p178 = pneg %p58
      %p179 = pneg %p55
      %p180 = pneg %p79
      %p181 = pneg %p76
      %p182 = pneg %p105
      %p183 = pneg %p102
      %p184 = scmp.lt.s32.totalorder %s16, 1
      %s185 = scalar_select %p184, %s16, 1
      %s186 = smul.addr %s185, 4
      %s187 = smul.addr %s186, 8
      %s188 = scalar_lea.vmem %s3, %s187
      %p189 = pneg %p131
      %p190 = pneg %p128
      %p191 = scmp.lt.s32.totalorder %s16, 1
      %s192 = scalar_select %p191, %s16, 1
      %s193 = smul.addr %s192, 4
      %s194 = smul.addr %s193, 8
      %s195 = scalar_lea.vmem %s4, %s194
      %p196 = scmp.lt.s32.totalorder %s16, 1
      %s197 = scalar_select %p196, %s16, 1
      %s198 = smul.addr %s197, 4
      %s199 = smul.addr %s198, 8
      %s200 = scalar_lea.vmem %s0, %s199
      %p201 = scmp.lt.s32.totalorder %s16, 1
      %s202 = scalar_select %p201, %s16, 1
      %s203 = smul.addr %s202, 4
      %s204 = smul.addr %s203, 8
      %s205 = scalar_lea.vmem %s3, %s204
      %p206 = scmp.lt.s32.totalorder %s16, 1
      %s207 = scalar_select %p206, %s16, 1
      %s208 = smul.addr %s207, 4
      %s209 = smul.addr %s208, 8
      %s210 = scalar_lea.vmem %s4, %s209
      %v211 = vld [vmem:[%s200] sm:$0xff]
      %v212 = vld [vmem:[%s200 + $0x8] sm:$0xff]
      %v213 = vld [vmem:[%s200 + $0x10] sm:$0xff]
      %v214 = vld [vmem:[%s200 + $0x18] sm:$0xff]
      %v215 = vmax.f32 %v211, 0.0
      %v216 = vmax.f32 %v212, 0.0
      %v217 = vmax.f32 %v213, 0.0
      %v218 = vmax.f32 %v214, 0.0
      %v219 = vld [vmem:[%s1] sm:$0xff]
      %v220 = vld [vmem:[%s1 + $0x8] sm:$0xff]
      %v221 = vld [vmem:[%s1 + $0x10] sm:$0xff]
      %v222 = vld [vmem:[%s1 + $0x18] sm:$0xff]
      %s223 = scalar_lea.vmem %s1, 32
      %v224 = vld [vmem:[%s223] sm:$0xff]
      %v225 = vld [vmem:[%s223 + $0x8] sm:$0xff]
      %v226 = vld [vmem:[%s223 + $0x10] sm:$0xff]
      %v227 = vld [vmem:[%s223 + $0x18] sm:$0xff]
      %s228 = scalar_lea.vmem %s1, 64
      %v229 = vld [vmem:[%s228] sm:$0xff]
      %v230 = vld [vmem:[%s228 + $0x8] sm:$0xff]
      %v231 = vld [vmem:[%s228 + $0x10] sm:$0xff]
      %v232 = vld [vmem:[%s228 + $0x18] sm:$0xff]
      %237 = vrot.lane.b32.xlu0 %v215, 1
      %v238 = vpop.permute.xlu0 %237
      %239 = vrot.lane.b32.xlu0 %v216, 1
      %v240 = vpop.permute.xlu0 %239
      %241 = vrot.lane.b32.xlu0 %v217, 1
      %v242 = vpop.permute.xlu0 %241
      %243 = vrot.lane.b32.xlu0 %v218, 1
      %v244 = vpop.permute.xlu0 %243
      %vm249 = vcmask 7168
      %v250 = vsel %vm249, 0.0, %v238
      %v251 = vsel %vm249, 0.0, %v240
      %v252 = vsel %vm249, 0.0, %v242
      %v253 = vsel %vm249, 0.0, %v244
      %vm254 = vcmask 261120
      %v256 = vsel %vm254, %v219, 0
      %v259 = vsel %vm254, %v220, 0
      %v262 = vsel %vm254, %v221, 0
      %v265 = vsel %vm254, %v222, 0
      %267 = vmatprep.subr.mxu0 0.0
      %268 = vmatpush1.msra.mxu0 0.0
      %269 = vmatprep.subr.mxu0 0.0
      %270 = vmatpush1.msra.mxu0 0.0
      %271 = vmatprep.subr.mxu0 0.0
      %272 = vmatpush1.msra.mxu0 0.0
      %273 = vmatprep.subr.mxu0 0.0
      %274 = vmatpush1.msra.mxu0 0.0
      %275 = vmatprep.subr.mxu0 0.0
      %276 = vmatpush1.msra.mxu0 0.0
      %277 = vmatprep.subr.mxu0 0.0
      %278 = vmatpush1.msra.mxu0 0.0
      %279 = vmatprep.subr.mxu0 0.0
      %280 = vmatpush1.msra.mxu0 0.0
      %281 = vmatprep.subr.mxu0 0.0
      %282 = vmatpush1.msra.mxu0 0.0
      %283 = vmatprep.subr.mxu0 0.0
      %284 = vmatpush1.msra.mxu0 0.0
      %285 = vmatprep.subr.mxu0 0.0
      %286 = vmatpush1.msra.mxu0 0.0
      %287 = vmatprep.subr.mxu0 0.0
      %288 = vmatpush1.msra.mxu0 0.0
      %289 = vmatprep.subr.mxu0 0.0
      %290 = vmatpush1.msra.mxu0 0.0
      %291 = vmatprep.subr.mxu0 0.0
      %292 = vmatpush1.msra.mxu0 %v253
      %293 = vmatprep.subr.mxu0 0.0
      %294 = vmatpush1.msra.mxu0 %v252
      %295 = vmatprep.subr.mxu0 0.0
      %296 = vmatpush1.msra.mxu0 %v251
      %297 = vmatprep.subr.mxu0 0.0
      %298 = vmatpush1.msra.mxu0 %v250
      %299 = vmatprep.subr.mxu0 0.0
      %300 = vmatpush2.msra.mxu0 0.0
      %301 = vmatprep.subr.mxu0 0.0
      %302 = vmatpush2.msra.mxu0 0.0
      %303 = vmatprep.subr.mxu0 0.0
      %304 = vmatpush2.msra.mxu0 0.0
      %305 = vmatprep.subr.mxu0 0.0
      %306 = vmatpush2.msra.mxu0 0.0
      %307 = vmatprep.subr.mxu0 0.0
      %308 = vmatpush2.msra.mxu0 0.0
      %309 = vmatprep.subr.mxu0 0.0
      %310 = vmatpush2.msra.mxu0 0.0
      %311 = vmatprep.subr.mxu0 0.0
      %312 = vmatpush2.msra.mxu0 0.0
      %313 = vmatprep.subr.mxu0 0.0
      %314 = vmatpush2.msra.mxu0 0.0
      %315 = vmatprep.subr.mxu0 0.0
      %316 = vmatpush2.msra.mxu0 0.0
      %317 = vmatprep.subr.mxu0 0.0
      %318 = vmatpush2.msra.mxu0 0.0
      %319 = vmatprep.subr.mxu0 0.0
      %320 = vmatpush2.msra.mxu0 0.0
      %321 = vmatprep.subr.mxu0 0.0
      %322 = vmatpush2.msra.mxu0 0.0
      %323 = vmatprep.subr.mxu0 0.0
      %324 = vmatpush2.msra.mxu0 0.0
      %325 = vmatprep.subr.mxu0 0.0
      %326 = vmatpush2.msra.mxu0 0.0
      %327 = vmatprep.subr.mxu0 0.0
      %328 = vmatpush2.msra.mxu0 0.0
      %329 = vmatprep.subr.mxu0 0.0
      %330 = vmatpush2.msra.mxu0 0.0
      %331 = vmatprep.mubr.f32.mxu0 0.0
      %332 = vmatmul.mubr.f32.gmra.mxu0 %v256
      %v333 = vpop.f32.mrf.mxu0
      %v334 = vadd.f32 0.0, %v333
      %v335 = vpop.f32.mrf.mxu0
      %336 = vmatprep.mubr.f32.mxu0 0.0
      %337 = vmatmul.mubr.f32.gmra.mxu0 %v259
      %v338 = vpop.f32.mrf.mxu0
      %v339 = vadd.f32 0.0, %v338
      %v340 = vpop.f32.mrf.mxu0
      %341 = vmatprep.mubr.f32.mxu0 0.0
      %342 = vmatmul.mubr.f32.gmra.mxu0 %v262
      %v343 = vpop.f32.mrf.mxu0
      %v344 = vadd.f32 0.0, %v343
      %v345 = vpop.f32.mrf.mxu0
      %346 = vmatprep.mubr.f32.mxu0 0.0
      %347 = vmatmul.mubr.f32.gmra.mxu0 %v265
      %v348 = vpop.f32.mrf.mxu0
      %v349 = vadd.f32 0.0, %v348
      %v350 = vpop.f32.mrf.mxu0
      %351 = vdwg.mxu0
      %v353 = vsel %vm254, %v224, 0
      %v356 = vsel %vm254, %v225, 0
      %v359 = vsel %vm254, %v226, 0
      %v362 = vsel %vm254, %v227, 0
      %364 = vmatprep.subr.mxu0 0.0
      %365 = vmatpush1.msra.mxu0 0.0
      %366 = vmatprep.subr.mxu0 0.0
      %367 = vmatpush1.msra.mxu0 0.0
      %368 = vmatprep.subr.mxu0 0.0
      %369 = vmatpush1.msra.mxu0 0.0
      %370 = vmatprep.subr.mxu0 0.0
      %371 = vmatpush1.msra.mxu0 0.0
      %372 = vmatprep.subr.mxu0 0.0
      %373 = vmatpush1.msra.mxu0 0.0
      %374 = vmatprep.subr.mxu0 0.0
      %375 = vmatpush1.msra.mxu0 0.0
      %376 = vmatprep.subr.mxu0 0.0
      %377 = vmatpush1.msra.mxu0 0.0
      %378 = vmatprep.subr.mxu0 0.0
      %379 = vmatpush1.msra.mxu0 0.0
      %380 = vmatprep.subr.mxu0 0.0
      %381 = vmatpush1.msra.mxu0 0.0
      %382 = vmatprep.subr.mxu0 0.0
      %383 = vmatpush1.msra.mxu0 0.0
      %384 = vmatprep.subr.mxu0 0.0
      %385 = vmatpush1.msra.mxu0 0.0
      %386 = vmatprep.subr.mxu0 0.0
      %387 = vmatpush1.msra.mxu0 0.0
      %388 = vmatprep.subr.mxu0 0.0
      %389 = vmatpush1.msra.mxu0 %v218
      %390 = vmatprep.subr.mxu0 0.0
      %391 = vmatpush1.msra.mxu0 %v217
      %392 = vmatprep.subr.mxu0 0.0
      %393 = vmatpush1.msra.mxu0 %v216
      %394 = vmatprep.subr.mxu0 0.0
      %395 = vmatpush1.msra.mxu0 %v215
      %396 = vmatprep.subr.mxu0 0.0
      %397 = vmatpush2.msra.mxu0 0.0
      %398 = vmatprep.subr.mxu0 0.0
      %399 = vmatpush2.msra.mxu0 0.0
      %400 = vmatprep.subr.mxu0 0.0
      %401 = vmatpush2.msra.mxu0 0.0
      %402 = vmatprep.subr.mxu0 0.0
      %403 = vmatpush2.msra.mxu0 0.0
      %404 = vmatprep.subr.mxu0 0.0
      %405 = vmatpush2.msra.mxu0 0.0
      %406 = vmatprep.subr.mxu0 0.0
      %407 = vmatpush2.msra.mxu0 0.0
      %408 = vmatprep.subr.mxu0 0.0
      %409 = vmatpush2.msra.mxu0 0.0
      %410 = vmatprep.subr.mxu0 0.0
      %411 = vmatpush2.msra.mxu0 0.0
      %412 = vmatprep.subr.mxu0 0.0
      %413 = vmatpush2.msra.mxu0 0.0
      %414 = vmatprep.subr.mxu0 0.0
      %415 = vmatpush2.msra.mxu0 0.0
      %416 = vmatprep.subr.mxu0 0.0
      %417 = vmatpush2.msra.mxu0 0.0
      %418 = vmatprep.subr.mxu0 0.0
      %419 = vmatpush2.msra.mxu0 0.0
      %420 = vmatprep.subr.mxu0 0.0
      %421 = vmatpush2.msra.mxu0 0.0
      %422 = vmatprep.subr.mxu0 0.0
      %423 = vmatpush2.msra.mxu0 0.0
      %424 = vmatprep.subr.mxu0 0.0
      %425 = vmatpush2.msra.mxu0 0.0
      %426 = vmatprep.subr.mxu0 0.0
      %427 = vmatpush2.msra.mxu0 0.0
      %428 = vmatprep.mubr.f32.mxu0 0.0
      %429 = vmatmul.mubr.f32.gmra.mxu0 %v353
      %v430 = vpop.f32.mrf.mxu0
      %v431 = vadd.f32 %v334, %v430
      %v432 = vpop.f32.mrf.mxu0
      %433 = vmatprep.mubr.f32.mxu0 0.0
      %434 = vmatmul.mubr.f32.gmra.mxu0 %v356
      %v435 = vpop.f32.mrf.mxu0
      %v436 = vadd.f32 %v339, %v435
      %v437 = vpop.f32.mrf.mxu0
      %438 = vmatprep.mubr.f32.mxu0 0.0
      %439 = vmatmul.mubr.f32.gmra.mxu0 %v359
      %v440 = vpop.f32.mrf.mxu0
      %v441 = vadd.f32 %v344, %v440
      %v442 = vpop.f32.mrf.mxu0
      %443 = vmatprep.mubr.f32.mxu0 0.0
      %444 = vmatmul.mubr.f32.gmra.mxu0 %v362
      %v445 = vpop.f32.mrf.mxu0
      %v446 = vadd.f32 %v349, %v445
      %v447 = vpop.f32.mrf.mxu0
      %448 = vdwg.mxu0
      %449 = vrot.lane.b32.xlu0 %v215, 127
      %v450 = vpop.permute.xlu0 %449
      %451 = vrot.lane.b32.xlu0 %v216, 127
      %v452 = vpop.permute.xlu0 %451
      %453 = vrot.lane.b32.xlu0 %v217, 127
      %v454 = vpop.permute.xlu0 %453
      %455 = vrot.lane.b32.xlu0 %v218, 127
      %v456 = vpop.permute.xlu0 %455
      %vm461 = vcmask 121856
      %v462 = vsel %vm461, %v450, 0.0
      %v463 = vsel %vm461, %v452, 0.0
      %v464 = vsel %vm461, %v454, 0.0
      %v465 = vsel %vm461, %v456, 0.0
      %v467 = vsel %vm254, %v229, 0
      %v470 = vsel %vm254, %v230, 0
      %v473 = vsel %vm254, %v231, 0
      %v476 = vsel %vm254, %v232, 0
      %478 = vmatprep.subr.mxu0 0.0
      %479 = vmatpush1.msra.mxu0 0.0
      %480 = vmatprep.subr.mxu0 0.0
      %481 = vmatpush1.msra.mxu0 0.0
      %482 = vmatprep.subr.mxu0 0.0
      %483 = vmatpush1.msra.mxu0 0.0
      %484 = vmatprep.subr.mxu0 0.0
      %485 = vmatpush1.msra.mxu0 0.0
      %486 = vmatprep.subr.mxu0 0.0
      %487 = vmatpush1.msra.mxu0 0.0
      %488 = vmatprep.subr.mxu0 0.0
      %489 = vmatpush1.msra.mxu0 0.0
      %490 = vmatprep.subr.mxu0 0.0
      %491 = vmatpush1.msra.mxu0 0.0
      %492 = vmatprep.subr.mxu0 0.0
      %493 = vmatpush1.msra.mxu0 0.0
      %494 = vmatprep.subr.mxu0 0.0
      %495 = vmatpush1.msra.mxu0 0.0
      %496 = vmatprep.subr.mxu0 0.0
      %497 = vmatpush1.msra.mxu0 0.0
      %498 = vmatprep.subr.mxu0 0.0
      %499 = vmatpush1.msra.mxu0 0.0
      %500 = vmatprep.subr.mxu0 0.0
      %501 = vmatpush1.msra.mxu0 0.0
      %502 = vmatprep.subr.mxu0 0.0
      %503 = vmatpush1.msra.mxu0 %v465
      %504 = vmatprep.subr.mxu0 0.0
      %505 = vmatpush1.msra.mxu0 %v464
      %506 = vmatprep.subr.mxu0 0.0
      %507 = vmatpush1.msra.mxu0 %v463
      %508 = vmatprep.subr.mxu0 0.0
      %509 = vmatpush1.msra.mxu0 %v462
      %510 = vmatprep.subr.mxu0 0.0
      %511 = vmatpush2.msra.mxu0 0.0
      %512 = vmatprep.subr.mxu0 0.0
      %513 = vmatpush2.msra.mxu0 0.0
      %514 = vmatprep.subr.mxu0 0.0
      %515 = vmatpush2.msra.mxu0 0.0
      %516 = vmatprep.subr.mxu0 0.0
      %517 = vmatpush2.msra.mxu0 0.0
      %518 = vmatprep.subr.mxu0 0.0
      %519 = vmatpush2.msra.mxu0 0.0
      %520 = vmatprep.subr.mxu0 0.0
      %521 = vmatpush2.msra.mxu0 0.0
      %522 = vmatprep.subr.mxu0 0.0
      %523 = vmatpush2.msra.mxu0 0.0
      %524 = vmatprep.subr.mxu0 0.0
      %525 = vmatpush2.msra.mxu0 0.0
      %526 = vmatprep.subr.mxu0 0.0
      %527 = vmatpush2.msra.mxu0 0.0
      %528 = vmatprep.subr.mxu0 0.0
      %529 = vmatpush2.msra.mxu0 0.0
      %530 = vmatprep.subr.mxu0 0.0
      %531 = vmatpush2.msra.mxu0 0.0
      %532 = vmatprep.subr.mxu0 0.0
      %533 = vmatpush2.msra.mxu0 0.0
      %534 = vmatprep.subr.mxu0 0.0
      %535 = vmatpush2.msra.mxu0 0.0
      %536 = vmatprep.subr.mxu0 0.0
      %537 = vmatpush2.msra.mxu0 0.0
      %538 = vmatprep.subr.mxu0 0.0
      %539 = vmatpush2.msra.mxu0 0.0
      %540 = vmatprep.subr.mxu0 0.0
      %541 = vmatpush2.msra.mxu0 0.0
      %542 = vmatprep.mubr.f32.mxu0 0.0
      %543 = vmatmul.mubr.f32.gmra.mxu0 %v467
      %v544 = vpop.f32.mrf.mxu0
      %v545 = vadd.f32 0.0, %v544
      %v546 = vpop.f32.mrf.mxu0
      %547 = vmatprep.mubr.f32.mxu0 0.0
      %548 = vmatmul.mubr.f32.gmra.mxu0 %v470
      %v549 = vpop.f32.mrf.mxu0
      %v550 = vadd.f32 0.0, %v549
      %v551 = vpop.f32.mrf.mxu0
      %552 = vmatprep.mubr.f32.mxu0 0.0
      %553 = vmatmul.mubr.f32.gmra.mxu0 %v473
      %v554 = vpop.f32.mrf.mxu0
      %v555 = vadd.f32 0.0, %v554
      %v556 = vpop.f32.mrf.mxu0
      %557 = vmatprep.mubr.f32.mxu0 0.0
      %558 = vmatmul.mubr.f32.gmra.mxu0 %v476
      %v559 = vpop.f32.mrf.mxu0
      %v560 = vadd.f32 0.0, %v559
      %v561 = vpop.f32.mrf.mxu0
      %562 = vdwg.mxu0
      %v563 = vadd.f32 %v431, %v545
      %v564 = vadd.f32 %v436, %v550
      %v565 = vadd.f32 %v441, %v555
      %v566 = vadd.f32 %v446, %v560
      %v567 = vld [vmem:[%s2] sm:$0xff]
      %v568 = vld [vmem:[%s2 + $0x8] sm:$0xff]
      %v569 = vld [vmem:[%s2 + $0x10] sm:$0xff]
      %v570 = vld [vmem:[%s2 + $0x18] sm:$0xff]
      %572 = vset.pattern.permute.xlu0 0
      %573 = vperm.xlu0 %572, %v567
      %v574 = vpop.permute.xlu0 %573
      %577 = vset.pattern.permute.xlu0 0
      %578 = vperm.xlu0 %577, %v568
      %v579 = vpop.permute.xlu0 %578
      %582 = vset.pattern.permute.xlu0 0
      %583 = vperm.xlu0 %582, %v569
      %v584 = vpop.permute.xlu0 %583
      %587 = vset.pattern.permute.xlu0 0
      %588 = vperm.xlu0 %587, %v570
      %v589 = vpop.permute.xlu0 %588
      %v591 = vadd.f32 %v563, %v574
      %v592 = vadd.f32 %v564, %v579
      %v593 = vadd.f32 %v565, %v584
      %v594 = vadd.f32 %v566, %v589
      %vm595 = vcmask 130048
      %596 = vst.msk [vmem:[%s205] sm:$0xff] %vm595, %v591
      %597 = vst.msk [vmem:[%s205 + $0x8] sm:$0xff] %vm595, %v592
      %598 = vst.msk [vmem:[%s205 + $0x10] sm:$0xff] %vm595, %v593
      %599 = vst.msk [vmem:[%s205 + $0x18] sm:$0xff] %vm595, %v594
      %v600 = vsel %vm595, %v591, 0.0
      %601 = vadd.xlane.f32.xlu0 %v600
      %v602 = vpop.xlane.xlu0 %601
      %v603 = vsel %vm595, %v592, 0.0
      %604 = vadd.xlane.f32.xlu0 %v603
      %v605 = vpop.xlane.xlu0 %604
      %v606 = vsel %vm595, %v593, 0.0
      %607 = vadd.xlane.f32.xlu0 %v606
      %v608 = vpop.xlane.xlu0 %607
      %v609 = vsel %vm595, %v594, 0.0
      %610 = vadd.xlane.f32.xlu0 %v609
      %v611 = vpop.xlane.xlu0 %610
      %v612 = vmul.f32 %v602, 0.0625
      %v613 = vmul.f32 %v605, 0.0625
      %v614 = vmul.f32 %v608, 0.0625
      %v615 = vmul.f32 %v611, 0.0625
      %v616 = vsub.f32 %v591, %v612
      %v617 = vsub.f32 %v592, %v613
      %v618 = vsub.f32 %v593, %v614
      %v619 = vsub.f32 %v594, %v615
      %v620 = vmul.f32 %v616, %v616
      %v621 = vmul.f32 %v617, %v617
      %v622 = vmul.f32 %v618, %v618
      %v623 = vmul.f32 %v619, %v619
      %v624 = vsel %vm595, %v620, 0.0
      %625 = vadd.xlane.f32.xlu0 %v624
      %v626 = vpop.xlane.xlu0 %625
      %v627 = vsel %vm595, %v621, 0.0
      %628 = vadd.xlane.f32.xlu0 %v627
      %v629 = vpop.xlane.xlu0 %628
      %v630 = vsel %vm595, %v622, 0.0
      %631 = vadd.xlane.f32.xlu0 %v630
      %v632 = vpop.xlane.xlu0 %631
      %v633 = vsel %vm595, %v623, 0.0
      %634 = vadd.xlane.f32.xlu0 %v633
      %v635 = vpop.xlane.xlu0 %634
      %v636 = vsel %vm249, %v612, %v626
      %v637 = vsel %vm249, %v613, %v629
      %v638 = vsel %vm249, %v614, %v632
      %v639 = vsel %vm249, %v615, %v635
      %vm640 = vcmask 15360
      %641 = vst.msk [vmem:[%s210] sm:$0xff] %vm640, %v636
      %642 = vst.msk [vmem:[%s210 + $0x8] sm:$0xff] %vm640, %v637
      %643 = vst.msk [vmem:[%s210 + $0x10] sm:$0xff] %vm640, %v638
      %644 = vst.msk [vmem:[%s210 + $0x18] sm:$0xff] %vm640, %v639
      %p645 = scmp.lt.s32.totalorder %s16, 1
      %s646 = scalar_select %p645, %s16, 1
      %s647 = smul.addr %s646, 4
      %s648 = smul.addr %s647, 8
      %s649 = scalar_lea.vmem %s3, %s648
      %p650 = scmp.lt.s32.totalorder %s16, 1
      %s651 = scalar_select %p650, %s16, 1
      %s652 = smul.addr %s651, 4
      %s653 = smul.addr %s652, 8
      %s654 = scalar_lea.vmem %s4, %s653
      // Predicated region
      $region33: #{resblock_pallas.3} parent=31 // pred_check
        %p655 = pneg %p102
      $region34: #{resblock_pallas.3} parent=31 // pred_check_branch
        %657 = sbr.rel (%p655) target = $region36
      $region35: #{resblock_pallas.3} parent=31 // pred_region
        _
      $region36: #{resblock_pallas.3} parent=31 // pred_fallthru
        _
      // Predicated region
      $region37: #{resblock_pallas.3} parent=31 // pred_check
        %p658 = pneg %p128
      $region38: #{resblock_pallas.3} parent=31 // pred_check_branch
        %660 = sbr.rel (%p658) target = $region40
      $region39: #{resblock_pallas.3} parent=31 // pred_region
        _
      $region40: #{resblock_pallas.3} parent=31 // pred_fallthru
        _
    $region32: #{resblock_pallas.3} parent=5 // pred_fallthru
      _
    %p661 = scmp.le.s32.totalorder 2, %s11
    // Predicated region
    $region41: #{resblock_pallas.3} parent=5 // pred_check
      %p662 = pneg %p661
    $region42: #{resblock_pallas.3} parent=5 // pred_check_branch
      %664 = sbr.rel (%p662) target = $region44
    $region43: #{resblock_pallas.3} parent=5 // pred_region
      %s665 = ssub.s32 %s11, 2
      // Predicated region
      $region45: #{resblock_pallas.3} parent=43 // pred_check
        %p666 = pneg %p108
      $region46: #{resblock_pallas.3} parent=43 // pred_check_branch
        %668 = sbr.rel (%p666) target = $region48
      $region47: #{resblock_pallas.3} parent=43 // pred_region
        %p669 = scmp.lt.s32.totalorder %s17, 1
        %s670 = scalar_select %p669, %s17, 1
        %s671 = smul.addr %s670, 4
        %s672 = smul.addr %s671, 8
        %s673 = scalar_lea.vmem %s3, %s672
      $region48: #{resblock_pallas.3} parent=43 // pred_fallthru
        _
      // Predicated region
      $region49: #{resblock_pallas.3} parent=43 // pred_check
        %p674 = pneg %p134
      $region50: #{resblock_pallas.3} parent=43 // pred_check_branch
        %676 = sbr.rel (%p674) target = $region52
      $region51: #{resblock_pallas.3} parent=43 // pred_region
        %p677 = scmp.lt.s32.totalorder %s17, 1
        %s678 = scalar_select %p677, %s17, 1
        %s679 = smul.addr %s678, 4
        %s680 = smul.addr %s679, 8
        %s681 = scalar_lea.vmem %s4, %s680
      $region52: #{resblock_pallas.3} parent=43 // pred_fallthru
        _
    $region44: #{resblock_pallas.3} parent=5 // pred_fallthru
      _
  $region6: #{resblock_pallas.3} parent=0 // loop_footer
    %s15 = sadd.s32 1, %s11
  $region7: #{resblock_pallas.3} parent=0 // loop_footer_branch
    %10 = sbr.rel target = $region3
  $region8: #{resblock_pallas.3} parent=0 // loop_exit
    _

// kernel: resblock_pallas.4
$region0: #{resblock_pallas.4}
  #allocation0 [shape = 'u32[]', space=smem, size = 0x4, offset = 0x4, fixed_abs, tag = 'smem constant byte address 0x4 - core index']
  #allocation1 [shape = 'u32[144,128]{1,0:T(1,128)}', space=vmem, size = 0x12000, scoped, tag = 'internal scratch']
  %s0 = inlined_call_operand.vmem [shape: f32[2,32,16], index: 0, kind: input, shape index: {}]
  %s1 = inlined_call_operand.vmem [shape: f32[32,32], index: 1, kind: input, shape index: {}]
  %s2 = inlined_call_operand.vmem [shape: f32[32,3], index: 2, kind: input, shape index: {}]
  %s3 = inlined_call_operand.vmem [shape: f32[2,32,16], index: 3, kind: output, shape index: {0}]
  %s4 = inlined_call_operand.vmem [shape: f32[2,32,2], index: 4, kind: output, shape index: {1}]
  %5 = xla_tuple %s3, %s4
  %s6 = sld [smem:[#allocation0]]
  $region53: #{resblock_pallas.4} parent=0
    _
  %s8 = ssub.s32 1, %s6
  %s9 = scalar_select 0, %s8, %s6
  loop: start=0, step=1, limit=4
  $region2: #{resblock_pallas.4} parent=0 // loop_pre_header
    _
  $region3: #{resblock_pallas.4} parent=0 // loop_header
    %s11 = sphi 0, %s15
    %p12 = scmp.ge.s32.totalorder %s11, 4
    %s21 = sphi 0, %s23
    %s24 = sphi 0, %s21
    %s25 = sphi 0, %s24
    %s41 = sphi 0, %s25
    %s45 = sphi 0, %s45
    %s47 = sphi 0, %s45
    %s48 = sphi 0, %s47
    %s62 = sphi 0, %s48
    %s66 = sphi 0, %s66
    %s68 = sphi 0, %s66
    %s69 = sphi 0, %s68
    %s83 = sphi 0, %s69
    %s89 = sphi 0, %s91
    %s92 = sphi 0, %s89
    %s93 = sphi 0, %s92
    %s109 = sphi 0, %s93
    %s115 = sphi 0, %s117
    %s118 = sphi 0, %s115
    %s119 = sphi 0, %s118
    %s135 = sphi 0, %s119
  $region4: #{resblock_pallas.4} parent=0 // loop_header_branch
    %14 = sbr.rel (%p12) target = $region8
  $region5: #{resblock_pallas.4} parent=0 // loop_body
    %s16 = ssub.s32 %s11, 1
    %s17 = ssub.s32 %s11, 2
    %s18 = sadd.s32 %s11, 1
    %s19 = ssub.s32 %s11, %s18
    %p20 = scmp.eq.s32.totalorder %s19, 0
    %s22 = sadd.s32 %s21, 1
    %s23 = scalar_select %p20, %s21, %s22
    %p26 = pneg %p20
    %p27 = scmp.eq.s32.totalorder %s11, 1
    %p28 = por %p26, %p27
    %p29 = scmp.ne.s32.totalorder %s21, %s24
    %p30 = scmp.eq.s32.totalorder %s11, 0
    %p31 = por %p29, %p30
    %p32 = scmp.ne.s32.totalorder %s21, %s24
    %p33 = scmp.eq.s32.totalorder %s16, 1
    %p34 = por %p32, %p33
    %p35 = scmp.ne.s32.totalorder %s24, %s25
    %p36 = scmp.eq.s32.totalorder %s16, 0
    %p37 = por %p35, %p36
    %p38 = scmp.ne.s32.totalorder %s24, %s25
    %p39 = scmp.eq.s32.totalorder %s17, 1
    %p40 = por %p38, %p39
    %p42 = scmp.ne.s32.totalorder %s25, %s41
    %p43 = scmp.eq.s32.totalorder %s17, 0
    %p44 = por %p42, %p43
    %s46 = sadd.s32 %s45, 1
    %p49 = scmp.eq.s32.totalorder %s11, 1
    %p50 = scmp.ne.s32.totalorder %s45, %s47
    %p51 = scmp.eq.s32.totalorder %s11, 0
    %p52 = por %p50, %p51
    %p53 = scmp.ne.s32.totalorder %s45, %s47
    %p54 = scmp.eq.s32.totalorder %s16, 1
    %p55 = por %p53, %p54
    %p56 = scmp.ne.s32.totalorder %s47, %s48
    %p57 = scmp.eq.s32.totalorder %s16, 0
    %p58 = por %p56, %p57
    %p59 = scmp.ne.s32.totalorder %s47, %s48
    %p60 = scmp.eq.s32.totalorder %s17, 1
    %p61 = por %p59, %p60
    %p63 = scmp.ne.s32.totalorder %s48, %s62
    %p64 = scmp.eq.s32.totalorder %s17, 0
    %p65 = por %p63, %p64
    %s67 = sadd.s32 %s66, 1
    %p70 = scmp.eq.s32.totalorder %s11, 1
    %p71 = scmp.ne.s32.totalorder %s66, %s68
    %p72 = scmp.eq.s32.totalorder %s11, 0
    %p73 = por %p71, %p72
    %p74 = scmp.ne.s32.totalorder %s66, %s68
    %p75 = scmp.eq.s32.totalorder %s16, 1
    %p76 = por %p74, %p75
    %p77 = scmp.ne.s32.totalorder %s68, %s69
    %p78 = scmp.eq.s32.totalorder %s16, 0
    %p79 = por %p77, %p78
    %p80 = scmp.ne.s32.totalorder %s68, %s69
    %p81 = scmp.eq.s32.totalorder %s17, 1
    %p82 = por %p80, %p81
    %p84 = scmp.ne.s32.totalorder %s69, %s83
    %p85 = scmp.eq.s32.totalorder %s17, 0
    %p86 = por %p84, %p85
    %s87 = ssub.s32 %s11, %s18
    %p88 = scmp.eq.s32.totalorder %s87, 0
    %s90 = sadd.s32 %s89, 1
    %s91 = scalar_select %p88, %s89, %s90
    %p94 = pneg %p88
    %p95 = scmp.eq.s32.totalorder %s11, 1
    %p96 = por %p94, %p95
    %p97 = scmp.ne.s32.totalorder %s89, %s92
    %p98 = scmp.eq.s32.totalorder %s11, 0
    %p99 = por %p97, %p98
    %p100 = scmp.ne.s32.totalorder %s89, %s92
    %p101 = scmp.eq.s32.totalorder %s16, 1
    %p102 = por %p100, %p101
    %p103 = scmp.ne.s32.totalorder %s92, %s93
    %p104 = scmp.eq.s32.totalorder %s16, 0
    %p105 = por %p103, %p104
    %p106 = scmp.ne.s32.totalorder %s92, %s93
    %p107 = scmp.eq.s32.totalorder %s17, 1
    %p108 = por %p106, %p107
    %p110 = scmp.ne.s32.totalorder %s93, %s109
    %p111 = scmp.eq.s32.totalorder %s17, 0
    %p112 = por %p110, %p111
    %s113 = ssub.s32 %s11, %s18
    %p114 = scmp.eq.s32.totalorder %s113, 0
    %s116 = sadd.s32 %s115, 1
    %s117 = scalar_select %p114, %s115, %s116
    %p120 = pneg %p114
    %p121 = scmp.eq.s32.totalorder %s11, 1
    %p122 = por %p120, %p121
    %p123 = scmp.ne.s32.totalorder %s115, %s118
    %p124 = scmp.eq.s32.totalorder %s11, 0
    %p125 = por %p123, %p124
    %p126 = scmp.ne.s32.totalorder %s115, %s118
    %p127 = scmp.eq.s32.totalorder %s16, 1
    %p128 = por %p126, %p127
    %p129 = scmp.ne.s32.totalorder %s118, %s119
    %p130 = scmp.eq.s32.totalorder %s16, 0
    %p131 = por %p129, %p130
    %p132 = scmp.ne.s32.totalorder %s118, %s119
    %p133 = scmp.eq.s32.totalorder %s17, 1
    %p134 = por %p132, %p133
    %p136 = scmp.ne.s32.totalorder %s119, %s135
    %p137 = scmp.eq.s32.totalorder %s17, 0
    %p138 = por %p136, %p137
    %p139 = scmp.le.s32.totalorder 1, %s11
    %p140 = scmp.lt.s32.totalorder %s11, 3
    %p141 = pnand %p139, %p140
    %p142 = pneg %p141
    // Predicated region
    $region9: #{resblock_pallas.4} parent=5 // pred_check
      _
    $region10: #{resblock_pallas.4} parent=5 // pred_check_branch
      %144 = sbr.rel (%p141) target = $region12
    $region11: #{resblock_pallas.4} parent=5 // pred_region
      %s145 = ssub.s32 %s11, 1
      // Predicated region
      $region13: #{resblock_pallas.4} parent=11 // pred_check
        %p146 = pneg %p58
      $region14: #{resblock_pallas.4} parent=11 // pred_check_branch
        %148 = sbr.rel (%p146) target = $region16
      $region15: #{resblock_pallas.4} parent=11 // pred_region
        _
      $region16: #{resblock_pallas.4} parent=11 // pred_fallthru
        _
      // Predicated region
      $region17: #{resblock_pallas.4} parent=11 // pred_check
        %p149 = pneg %p79
      $region18: #{resblock_pallas.4} parent=11 // pred_check_branch
        %151 = sbr.rel (%p149) target = $region20
      $region19: #{resblock_pallas.4} parent=11 // pred_region
        _
      $region20: #{resblock_pallas.4} parent=11 // pred_fallthru
        _
    $region12: #{resblock_pallas.4} parent=5 // pred_fallthru
      _
    %p152 = scmp.lt.s32.totalorder %s11, 2
    // Predicated region
    $region21: #{resblock_pallas.4} parent=5 // pred_check
      %p153 = pneg %p152
    $region22: #{resblock_pallas.4} parent=5 // pred_check_branch
      %155 = sbr.rel (%p153) target = $region24
    $region23: #{resblock_pallas.4} parent=5 // pred_region
      // Predicated region
      $region25: #{resblock_pallas.4} parent=23 // pred_check
        %p156 = pneg %p31
      $region26: #{resblock_pallas.4} parent=23 // pred_check_branch
        %158 = sbr.rel (%p156) target = $region28
      $region27: #{resblock_pallas.4} parent=23 // pred_region
        %p159 = scmp.lt.s32.totalorder %s11, 1
        %s160 = scalar_select %p159, %s11, 1
        %s161 = smul.addr %s160, 4
        %s162 = smul.addr %s161, 8
        %s163 = scalar_lea.vmem %s0, %s162
      $region28: #{resblock_pallas.4} parent=23 // pred_fallthru
        _
    $region24: #{resblock_pallas.4} parent=5 // pred_fallthru
      _
    %p164 = scmp.le.s32.totalorder 1, %s11
    %p165 = scmp.lt.s32.totalorder %s11, 3
    %p166 = pnand %p164, %p165
    %p167 = pneg %p166
    // Predicated region
    $region29: #{resblock_pallas.4} parent=5 // pred_check
      _
    $region30: #{resblock_pallas.4} parent=5 // pred_check_branch
      %169 = sbr.rel (%p166) target = $region32
    $region31: #{resblock_pallas.4} parent=5 // pred_region
      %s170 = ssub.s32 %s11, 1
      %p171 = scmp.lt.s32.totalorder %s16, 1
      %s172 = scalar_select %p171, %s16, 1
      %s173 = smul.addr %s172, 4
      %s174 = smul.addr %s173, 8
      %s175 = scalar_lea.vmem %s0, %s174
      %p176 = pneg %p37
      %p177 = pneg %p34
      %p178 = pneg %p58
      %p179 = pneg %p55
      %p180 = pneg %p79
      %p181 = pneg %p76
      %p182 = pneg %p105
      %p183 = pneg %p102
      %p184 = scmp.lt.s32.totalorder %s16, 1
      %s185 = scalar_select %p184, %s16, 1
      %s186 = smul.addr %s185, 4
      %s187 = smul.addr %s186, 8
      %s188 = scalar_lea.vmem %s3, %s187
      %p189 = pneg %p131
      %p190 = pneg %p128
      %p191 = scmp.lt.s32.totalorder %s16, 1
      %s192 = scalar_select %p191, %s16, 1
      %s193 = smul.addr %s192, 4
      %s194 = smul.addr %s193, 8
      %s195 = scalar_lea.vmem %s4, %s194
      %p196 = scmp.lt.s32.totalorder %s16, 1
      %s197 = scalar_select %p196, %s16, 1
      %s198 = smul.addr %s197, 4
      %s199 = smul.addr %s198, 8
      %s200 = scalar_lea.vmem %s0, %s199
      %p201 = scmp.lt.s32.totalorder %s16, 1
      %s202 = scalar_select %p201, %s16, 1
      %s203 = smul.addr %s202, 4
      %s204 = smul.addr %s203, 8
      %s205 = scalar_lea.vmem %s3, %s204
      %p206 = scmp.lt.s32.totalorder %s16, 1
      %s207 = scalar_select %p206, %s16, 1
      %s208 = smul.addr %s207, 4
      %s209 = smul.addr %s208, 8
      %s210 = scalar_lea.vmem %s4, %s209
      %v211 = vld [vmem:[%s200] sm:$0xff]
      %v212 = vld [vmem:[%s200 + $0x8] sm:$0xff]
      %v213 = vld [vmem:[%s200 + $0x10] sm:$0xff]
      %v214 = vld [vmem:[%s200 + $0x18] sm:$0xff]
      %v215 = vld [vmem:[%s2] sm:$0xff]
      %v216 = vld [vmem:[%s2 + $0x8] sm:$0xff]
      %v217 = vld [vmem:[%s2 + $0x10] sm:$0xff]
      %v218 = vld [vmem:[%s2 + $0x18] sm:$0xff]
      %220 = vset.pattern.permute.xlu0 0
      %221 = vperm.xlu0 %220, %v215
      %v222 = vpop.permute.xlu0 %221
      %225 = vset.pattern.permute.xlu0 0
      %226 = vperm.xlu0 %225, %v216
      %v227 = vpop.permute.xlu0 %226
      %230 = vset.pattern.permute.xlu0 0
      %231 = vperm.xlu0 %230, %v217
      %v232 = vpop.permute.xlu0 %231
      %235 = vset.pattern.permute.xlu0 0
      %236 = vperm.xlu0 %235, %v218
      %v237 = vpop.permute.xlu0 %236
      %v239 = vmul.f32 %v211, %v222
      %v240 = vmul.f32 %v212, %v227
      %v241 = vmul.f32 %v213, %v232
      %v242 = vmul.f32 %v214, %v237
      %243 = vset.pattern.permute.xlu0 1
      %244 = vperm.xlu0 %243, %v215
      %v245 = vpop.permute.xlu0 %244
      %247 = vset.pattern.permute.xlu0 1
      %248 = vperm.xlu0 %247, %v216
      %v249 = vpop.permute.xlu0 %248
      %251 = vset.pattern.permute.xlu0 1
      %252 = vperm.xlu0 %251, %v217
      %v253 = vpop.permute.xlu0 %252
      %255 = vset.pattern.permute.xlu0 1
      %256 = vperm.xlu0 %255, %v218
      %v257 = vpop.permute.xlu0 %256
      %v259 = vadd.f32 %v239, %v245
      %v260 = vadd.f32 %v240, %v249
      %v261 = vadd.f32 %v241, %v253
      %v262 = vadd.f32 %v242, %v257
      %v263 = vmax.f32 %v259, 0.0
      %v264 = vmax.f32 %v260, 0.0
      %v265 = vmax.f32 %v261, 0.0
      %v266 = vmax.f32 %v262, 0.0
      %v267 = vld [vmem:[%s1] sm:$0xff]
      %v268 = vld [vmem:[%s1 + $0x8] sm:$0xff]
      %v269 = vld [vmem:[%s1 + $0x10] sm:$0xff]
      %v270 = vld [vmem:[%s1 + $0x18] sm:$0xff]
      %271 = vset.pattern.permute.xlu0 2
      %272 = vperm.xlu0 %271, %v215
      %v273 = vpop.permute.xlu0 %272
      %275 = vset.pattern.permute.xlu0 2
      %276 = vperm.xlu0 %275, %v216
      %v277 = vpop.permute.xlu0 %276
      %279 = vset.pattern.permute.xlu0 2
      %280 = vperm.xlu0 %279, %v217
      %v281 = vpop.permute.xlu0 %280
      %283 = vset.pattern.permute.xlu0 2
      %284 = vperm.xlu0 %283, %v218
      %v285 = vpop.permute.xlu0 %284
      %vm287 = vcmask 261120
      %v289 = vsel %vm287, %v267, 0
      %v292 = vsel %vm287, %v268, 0
      %v295 = vsel %vm287, %v269, 0
      %v298 = vsel %vm287, %v270, 0
      %300 = vmatprep.subr.mxu0 0.0
      %301 = vmatpush1.msra.mxu0 0.0
      %302 = vmatprep.subr.mxu0 0.0
      %303 = vmatpush1.msra.mxu0 0.0
      %304 = vmatprep.subr.mxu0 0.0
      %305 = vmatpush1.msra.mxu0 0.0
      %306 = vmatprep.subr.mxu0 0.0
      %307 = vmatpush1.msra.mxu0 0.0
      %308 = vmatprep.subr.mxu0 0.0
      %309 = vmatpush1.msra.mxu0 0.0
      %310 = vmatprep.subr.mxu0 0.0
      %311 = vmatpush1.msra.mxu0 0.0
      %312 = vmatprep.subr.mxu0 0.0
      %313 = vmatpush1.msra.mxu0 0.0
      %314 = vmatprep.subr.mxu0 0.0
      %315 = vmatpush1.msra.mxu0 0.0
      %316 = vmatprep.subr.mxu0 0.0
      %317 = vmatpush1.msra.mxu0 0.0
      %318 = vmatprep.subr.mxu0 0.0
      %319 = vmatpush1.msra.mxu0 0.0
      %320 = vmatprep.subr.mxu0 0.0
      %321 = vmatpush1.msra.mxu0 0.0
      %322 = vmatprep.subr.mxu0 0.0
      %323 = vmatpush1.msra.mxu0 0.0
      %324 = vmatprep.subr.mxu0 0.0
      %325 = vmatpush1.msra.mxu0 %v266
      %326 = vmatprep.subr.mxu0 0.0
      %327 = vmatpush1.msra.mxu0 %v265
      %328 = vmatprep.subr.mxu0 0.0
      %329 = vmatpush1.msra.mxu0 %v264
      %330 = vmatprep.subr.mxu0 0.0
      %331 = vmatpush1.msra.mxu0 %v263
      %332 = vmatprep.subr.mxu0 0.0
      %333 = vmatpush2.msra.mxu0 0.0
      %334 = vmatprep.subr.mxu0 0.0
      %335 = vmatpush2.msra.mxu0 0.0
      %336 = vmatprep.subr.mxu0 0.0
      %337 = vmatpush2.msra.mxu0 0.0
      %338 = vmatprep.subr.mxu0 0.0
      %339 = vmatpush2.msra.mxu0 0.0
      %340 = vmatprep.subr.mxu0 0.0
      %341 = vmatpush2.msra.mxu0 0.0
      %342 = vmatprep.subr.mxu0 0.0
      %343 = vmatpush2.msra.mxu0 0.0
      %344 = vmatprep.subr.mxu0 0.0
      %345 = vmatpush2.msra.mxu0 0.0
      %346 = vmatprep.subr.mxu0 0.0
      %347 = vmatpush2.msra.mxu0 0.0
      %348 = vmatprep.subr.mxu0 0.0
      %349 = vmatpush2.msra.mxu0 0.0
      %350 = vmatprep.subr.mxu0 0.0
      %351 = vmatpush2.msra.mxu0 0.0
      %352 = vmatprep.subr.mxu0 0.0
      %353 = vmatpush2.msra.mxu0 0.0
      %354 = vmatprep.subr.mxu0 0.0
      %355 = vmatpush2.msra.mxu0 0.0
      %356 = vmatprep.subr.mxu0 0.0
      %357 = vmatpush2.msra.mxu0 0.0
      %358 = vmatprep.subr.mxu0 0.0
      %359 = vmatpush2.msra.mxu0 0.0
      %360 = vmatprep.subr.mxu0 0.0
      %361 = vmatpush2.msra.mxu0 0.0
      %362 = vmatprep.subr.mxu0 0.0
      %363 = vmatpush2.msra.mxu0 0.0
      %364 = vmatprep.mubr.f32.mxu0 0.0
      %365 = vmatmul.mubr.f32.gmra.mxu0 %v289
      %v366 = vpop.f32.mrf.mxu0
      %v367 = vadd.f32 %v273, %v366
      %v368 = vpop.f32.mrf.mxu0
      %369 = vmatprep.mubr.f32.mxu0 0.0
      %370 = vmatmul.mubr.f32.gmra.mxu0 %v292
      %v371 = vpop.f32.mrf.mxu0
      %v372 = vadd.f32 %v277, %v371
      %v373 = vpop.f32.mrf.mxu0
      %374 = vmatprep.mubr.f32.mxu0 0.0
      %375 = vmatmul.mubr.f32.gmra.mxu0 %v295
      %v376 = vpop.f32.mrf.mxu0
      %v377 = vadd.f32 %v281, %v376
      %v378 = vpop.f32.mrf.mxu0
      %379 = vmatprep.mubr.f32.mxu0 0.0
      %380 = vmatmul.mubr.f32.gmra.mxu0 %v298
      %v381 = vpop.f32.mrf.mxu0
      %v382 = vadd.f32 %v285, %v381
      %v383 = vpop.f32.mrf.mxu0
      %384 = vdwg.mxu0
      %vm385 = vcmask 130048
      %386 = vst.msk [vmem:[%s205] sm:$0xff] %vm385, %v367
      %387 = vst.msk [vmem:[%s205 + $0x8] sm:$0xff] %vm385, %v372
      %388 = vst.msk [vmem:[%s205 + $0x10] sm:$0xff] %vm385, %v377
      %389 = vst.msk [vmem:[%s205 + $0x18] sm:$0xff] %vm385, %v382
      %v390 = vsel %vm385, %v367, 0.0
      %391 = vadd.xlane.f32.xlu0 %v390
      %v392 = vpop.xlane.xlu0 %391
      %v393 = vsel %vm385, %v372, 0.0
      %394 = vadd.xlane.f32.xlu0 %v393
      %v395 = vpop.xlane.xlu0 %394
      %v396 = vsel %vm385, %v377, 0.0
      %397 = vadd.xlane.f32.xlu0 %v396
      %v398 = vpop.xlane.xlu0 %397
      %v399 = vsel %vm385, %v382, 0.0
      %400 = vadd.xlane.f32.xlu0 %v399
      %v401 = vpop.xlane.xlu0 %400
      %v402 = vmul.f32 %v392, 0.0625
      %v403 = vmul.f32 %v395, 0.0625
      %v404 = vmul.f32 %v398, 0.0625
      %v405 = vmul.f32 %v401, 0.0625
      %v406 = vsub.f32 %v367, %v402
      %v407 = vsub.f32 %v372, %v403
      %v408 = vsub.f32 %v377, %v404
      %v409 = vsub.f32 %v382, %v405
      %v410 = vmul.f32 %v406, %v406
      %v411 = vmul.f32 %v407, %v407
      %v412 = vmul.f32 %v408, %v408
      %v413 = vmul.f32 %v409, %v409
      %v414 = vsel %vm385, %v410, 0.0
      %415 = vadd.xlane.f32.xlu0 %v414
      %v416 = vpop.xlane.xlu0 %415
      %v417 = vsel %vm385, %v411, 0.0
      %418 = vadd.xlane.f32.xlu0 %v417
      %v419 = vpop.xlane.xlu0 %418
      %v420 = vsel %vm385, %v412, 0.0
      %421 = vadd.xlane.f32.xlu0 %v420
      %v422 = vpop.xlane.xlu0 %421
      %v423 = vsel %vm385, %v413, 0.0
      %424 = vadd.xlane.f32.xlu0 %v423
      %v425 = vpop.xlane.xlu0 %424
      %vm426 = vcmask 7168
      %v427 = vsel %vm426, %v402, %v416
      %v428 = vsel %vm426, %v403, %v419
      %v429 = vsel %vm426, %v404, %v422
      %v430 = vsel %vm426, %v405, %v425
      %vm431 = vcmask 15360
      %432 = vst.msk [vmem:[%s210] sm:$0xff] %vm431, %v427
      %433 = vst.msk [vmem:[%s210 + $0x8] sm:$0xff] %vm431, %v428
      %434 = vst.msk [vmem:[%s210 + $0x10] sm:$0xff] %vm431, %v429
      %435 = vst.msk [vmem:[%s210 + $0x18] sm:$0xff] %vm431, %v430
      %p436 = scmp.lt.s32.totalorder %s16, 1
      %s437 = scalar_select %p436, %s16, 1
      %s438 = smul.addr %s437, 4
      %s439 = smul.addr %s438, 8
      %s440 = scalar_lea.vmem %s3, %s439
      %p441 = scmp.lt.s32.totalorder %s16, 1
      %s442 = scalar_select %p441, %s16, 1
      %s443 = smul.addr %s442, 4
      %s444 = smul.addr %s443, 8
      %s445 = scalar_lea.vmem %s4, %s444
      // Predicated region
      $region33: #{resblock_pallas.4} parent=31 // pred_check
        %p446 = pneg %p102
      $region34: #{resblock_pallas.4} parent=31 // pred_check_branch
        %448 = sbr.rel (%p446) target = $region36
      $region35: #{resblock_pallas.4} parent=31 // pred_region
        _
      $region36: #{resblock_pallas.4} parent=31 // pred_fallthru
        _
      // Predicated region
      $region37: #{resblock_pallas.4} parent=31 // pred_check
        %p449 = pneg %p128
      $region38: #{resblock_pallas.4} parent=31 // pred_check_branch
        %451 = sbr.rel (%p449) target = $region40
      $region39: #{resblock_pallas.4} parent=31 // pred_region
        _
      $region40: #{resblock_pallas.4} parent=31 // pred_fallthru
        _
    $region32: #{resblock_pallas.4} parent=5 // pred_fallthru
      _
    %p452 = scmp.le.s32.totalorder 2, %s11
    // Predicated region
    $region41: #{resblock_pallas.4} parent=5 // pred_check
      %p453 = pneg %p452
    $region42: #{resblock_pallas.4} parent=5 // pred_check_branch
      %455 = sbr.rel (%p453) target = $region44
    $region43: #{resblock_pallas.4} parent=5 // pred_region
      %s456 = ssub.s32 %s11, 2
      // Predicated region
      $region45: #{resblock_pallas.4} parent=43 // pred_check
        %p457 = pneg %p108
      $region46: #{resblock_pallas.4} parent=43 // pred_check_branch
        %459 = sbr.rel (%p457) target = $region48
      $region47: #{resblock_pallas.4} parent=43 // pred_region
        %p460 = scmp.lt.s32.totalorder %s17, 1
        %s461 = scalar_select %p460, %s17, 1
        %s462 = smul.addr %s461, 4
        %s463 = smul.addr %s462, 8
        %s464 = scalar_lea.vmem %s3, %s463
      $region48: #{resblock_pallas.4} parent=43 // pred_fallthru
        _
      // Predicated region
      $region49: #{resblock_pallas.4} parent=43 // pred_check
        %p465 = pneg %p134
      $region50: #{resblock_pallas.4} parent=43 // pred_check_branch
        %467 = sbr.rel (%p465) target = $region52
      $region51: #{resblock_pallas.4} parent=43 // pred_region
        %p468 = scmp.lt.s32.totalorder %s17, 1
        %s469 = scalar_select %p468, %s17, 1
        %s470 = smul.addr %s469, 4
        %s471 = smul.addr %s470, 8
        %s472 = scalar_lea.vmem %s4, %s471
      $region52: #{resblock_pallas.4} parent=43 // pred_fallthru
        _
    $region44: #{resblock_pallas.4} parent=5 // pred_fallthru
      _
  $region6: #{resblock_pallas.4} parent=0 // loop_footer
    %s15 = sadd.s32 1, %s11
  $region7: #{resblock_pallas.4} parent=0 // loop_footer_branch
    %10 = sbr.rel target = $region3
  $region8: #{resblock_pallas.4} parent=0 // loop_exit
    _

</llo_original>
